<compile_context>
chip_gen: v7x
topology: tpu7x:2x2x1
jax: 0.10.0
libtpu: 0.0.40
codegen_flags: <defaults>
</compile_context>

<pallas_src>
import functools

import numpy as np
import jax
import jax.numpy as jnp
from jax.experimental import pallas as pl
from jax.experimental.pallas import tpu as pltpu


# Stage-2 tap table: for output-row parity a (resp. column parity b) and conv
# kernel row e2 (resp. column f2): which ConvT parity plane is read (g / h) and
# at which padded-parity-plane row/col offset.
_TAP = (((1, 0), (0, 1), (1, 1)),     # a == 0
        ((0, 1), (1, 1), (0, 2)))     # a == 1
# The 4 distinct (plane parity, offset) pairs appearing in _TAP.  The stage-2
# im2col operand carries all 4x4 = 16 row/col slot combinations exactly once;
# the per-output-parity weight matrices pick their 9 taps out of the 16 slots.
_SLOTS = ((1, 0), (0, 1), (1, 1), (0, 2))


def _fused_convt_pad_conv_kernel(xpf_ref, w1_ref, bT_ref, w2_ref, b2_ref,
                                 m1_ref, m2_ref,
                                 y_ref, s1_ref, s2_ref, p_ref, *, wrow):
    """Fused ConvT(4, s=2) + ZeroPad(1) + Conv(3x3) + BN partial sums.

    One grid step processes a block of `bt` batch elements.

    xpf_ref : (bt, Cin, Kin)     zero-padded inputs, spatial flattened (row stride wrow)
    w1_ref  : (4, Cmid, 4*Cin)   stage-1 weights, taps folded into the contraction
    bT_ref  : (Cmid, 1)          ConvT bias
    w2_ref  : (4, Cout, 16*Cmid) stage-2 weights over the shared 16-slot operand
    b2_ref  : (Cout, 1)          Conv2d bias
    m1_ref  : (1, K1)            stage-1 non-wrap-column 0/1 mask
    m2_ref  : (1, K2)            stage-2 valid-column 0/1 mask (BN stats)
    y_ref   : (bt, 4, Cout, K2)  bf16 conv output, one flattened plane per parity
    s1_ref  : (Cout, 1)          per-channel sum of valid outputs over the block
    s2_ref  : (Cout, 1)          per-channel sum of squares over the block
    p_ref   : (4, Cmid, PFLAT)   VMEM scratch: zero-padded ConvT parity planes
    """
    bt = xpf_ref.shape[0]
    cmid = p_ref.shape[1]
    cout = b2_ref.shape[0]
    k1 = m1_ref.shape[-1]
    k2 = m2_ref.shape[-1]
    pflat = p_ref.shape[-1]
    interior = wrow + 1          # flat offset of padded-plane position (1, 1)
    back = interior + k1         # first flat index past the written interior

    # Only the border strips of the scratch must be zero (padding that stage 2
    # reads); the interior -- including the wrap columns, which stage 1 masks
    # to zero -- is fully rewritten for every batch element.  Done every grid
    # step (NOT gated on program_id==0: each TensorCore has its own scratch).
    p_ref[:, :, :interior] = jnp.zeros((4, cmid, interior), jnp.float32)
    p_ref[:, :, back:] = jnp.zeros((4, cmid, pflat - back), jnp.float32)

    tot1 = jnp.zeros((cout, 1), jnp.float32)
    tot2 = jnp.zeros((cout, 1), jnp.float32)

    for n in range(bt):          # small, static batch-tile loop
        # ---- Stage 1: ConvTranspose2d(k=4, stride=2) as 4 parity planes ----
        # Taps folded into the contraction: one (Cmid, 4*Cin) @ (4*Cin, K1)
        # matmul per parity; the shifted-patch operand is shared by all 4.
        x1 = jnp.concatenate(
            [xpf_ref[n, :, e * wrow + f:e * wrow + f + k1]
             for e in range(2) for f in range(2)], axis=0)        # (4*Cin, K1)
        for par in range(4):
            plane = jnp.dot(w1_ref[par], x1,
                            preferred_element_type=jnp.float32)   # (Cmid, K1)
            plane = (plane + bT_ref[...]) * m1_ref[...]           # zero wrap cols
            p_ref[par, :, interior:interior + k1] = plane

        # ---- Stage 2: ZeroPad2d(1) + Conv2d(3x3) in parity space ----------
        # Shared 16-slot im2col operand; one (Cout, 16*Cmid) matmul per parity.
        x2 = jnp.concatenate(
            [p_ref[g * 2 + h, :, r * wrow + c:r * wrow + c + k2]
             for (g, r) in _SLOTS for (h, c) in _SLOTS], axis=0)  # (16*Cmid, K2)
        for par in range(4):
            plane = jnp.dot(w2_ref[par], x2,
                            preferred_element_type=jnp.float32)   # (Cout, K2)
            plane = plane + b2_ref[...]
            y_ref[n, par] = plane.astype(y_ref.dtype)             # bf16 store
            valid = plane * m2_ref[...]
            tot1 = tot1 + jnp.sum(valid, axis=1, keepdims=True)
            tot2 = tot2 + jnp.sum(valid * plane, axis=1, keepdims=True)

    s1_ref[...] = tot1
    s2_ref[...] = tot2


def _replicated_spec(shape):
    """Whole-array block, identical for every grid step (small weights/masks)."""
    nd = len(shape)
    return pl.BlockSpec(tuple(shape), lambda n: (0,) * nd)


def conv_transpose_block_2d(x, wT, bT, w2, b2, gamma, beta, eps=1e-5):
    """JAX/Pallas forward of ConvTransposeBlock2D (module defaults). NCHW in/out."""
    N, Cin, H, W = x.shape
    assert H == W, "square inputs only"          # TODO(synk): rectangular inputs
    assert wT.shape == (Cin, Cin, 4, 4)
    assert w2.shape[1:] == (Cin, 3, 3)
    Cout = w2.shape[0]

    U = H + 1                   # parity-plane extent; ConvT output is 2U x 2U
    Ho = 2 * U
    wrow = U + 2                # flat row stride == padded parity-plane width
    K1 = (U - 1) * wrow + U     # stage-1 flattened extent
    K2 = U * wrow               # stage-2 flattened extent -> reshapes to (U, wrow)
    PFLAT = K2 + 2 * wrow + 2   # padded parity-plane scratch (covers max tap read)

    f32 = jnp.float32
    # Zero-padded input, spatial flattened at row stride `wrow`.
    xp = jnp.pad(x.astype(f32), ((0, 0), (0, 0), (1, 1), (1, wrow - W - 1)))
    xpf = xp.reshape(N, Cin, (H + 2) * wrow)
    Kin = xpf.shape[-1]

    # ---- host-side weight prep (tiny trace-time layout plumbing) ------------
    # Stage 1: per parity, fold the 4 ConvT taps into the contraction dim.
    w1cat = jnp.stack([
        jnp.concatenate(
            [wT[:, :, a + 2 - 2 * e, b + 2 - 2 * f].T
             for e in range(2) for f in range(2)], axis=1)
        for a in range(2) for b in range(2)]).astype(f32)       # (4, Cmid, 4*Cin)

    # Stage 2: per parity, (Cout, 16*Cmid) weights over the shared 16-slot
    # operand; slots that the parity's 9 taps do not use get zero blocks.
    def _slot_block(a, b, ri, ci):
        e2 = [e for e in range(3) if _TAP[a][e] == _SLOTS[ri]]
        f2 = [f for f in range(3) if _TAP[b][f] == _SLOTS[ci]]
        if e2 and f2:
            return w2[:, :, e2[0], f2[0]].astype(f32)
        return jnp.zeros((Cout, Cin), f32)

    w2big = jnp.stack([
        jnp.concatenate([_slot_block(a, b, ri, ci)
                         for ri in range(4) for ci in range(4)], axis=1)
        for a in range(2) for b in range(2)])                   # (4, Cout, 16*Cmid)

    bT2 = bT.reshape(Cin, 1).astype(f32)
    b22 = b2.reshape(Cout, 1).astype(f32)
    m1 = (jnp.arange(K1) % wrow < U).astype(f32).reshape(1, K1)
    m2 = (jnp.arange(K2) % wrow < U).astype(f32).reshape(1, K2)

    # Batch-block the grid to amortize the fixed per-step cost while keeping
    # >= 2 grid steps when possible (both v7x TensorCores stay busy).
    Bt = 1
    for cand in (8, 4, 2):
        if N % cand == 0 and N // cand >= 2:
            Bt = cand
            break
    G = N // Bt

    cparams = pltpu.CompilerParams(
        dimension_semantics=("parallel",),
        vmem_limit_bytes=32 * 1024 * 1024)

    kernel = functools.partial(_fused_convt_pad_conv_kernel, wrow=wrow)
    y_par, s1, s2 = pl.pallas_call(
        kernel,
        grid=(G,),
        in_specs=[
            pl.BlockSpec((Bt, Cin, Kin), lambda n: (n, 0, 0)),
            _replicated_spec(w1cat.shape),
            _replicated_spec(bT2.shape),
            _replicated_spec(w2big.shape),
            _replicated_spec(b22.shape),
            _replicated_spec(m1.shape),
            _replicated_spec(m2.shape),
        ],
        out_specs=[
            pl.BlockSpec((Bt, 4, Cout, K2), lambda n: (n, 0, 0, 0)),
            pl.BlockSpec((None, Cout, 1), lambda n: (n, 0, 0)),
            pl.BlockSpec((None, Cout, 1), lambda n: (n, 0, 0)),
        ],
        out_shape=[
            jax.ShapeDtypeStruct((N, 4, Cout, K2), jnp.bfloat16),
            jax.ShapeDtypeStruct((G, Cout, 1), f32),
            jax.ShapeDtypeStruct((G, Cout, 1), f32),
        ],
        scratch_shapes=[pltpu.VMEM((4, Cin, PFLAT), f32)],
        compiler_params=cparams,
    )(xpf, w1cat, bT2, w2big, b22, m1, m2)

    # BatchNorm2d training-mode batch statistics from the in-kernel partials.
    cnt = float(N * Ho * Ho)
    mean = jnp.sum(s1, axis=0)[:, 0] / cnt
    ex2 = jnp.sum(s2, axis=0)[:, 0] / cnt
    var = ex2 - mean * mean
    inv = jax.lax.rsqrt(var + eps)
    g32 = gamma.astype(f32)
    scale = (g32 * inv).reshape(1, 1, Cout, 1)
    shift = (beta.astype(f32) - mean * g32 * inv).reshape(1, 1, Cout, 1)

    # BN apply + ReLU + de-parity/unflatten as plain jnp: XLA fuses these into
    # one pass (single read of the bf16 intermediate, single NCHW write).
    y = jnp.maximum(y_par.astype(f32) * scale + shift, 0.0)
    y = y.reshape(N, 2, 2, Cout, U, wrow)[..., :U]
    y = jnp.transpose(y, (0, 3, 4, 1, 5, 2)).reshape(N, Cout, Ho, Ho)
    return y.astype(x.dtype)


def _reference_forward(x, wT, bT, w2, b2, gamma, beta, eps=1e-5):
    """Pure NumPy (float64) reference reproducing the PyTorch module semantics."""
    x = np.asarray(x, np.float64)
    wT = np.asarray(wT, np.float64)
    bT = np.asarray(bT, np.float64)
    w2 = np.asarray(w2, np.float64)
    b2 = np.asarray(b2, np.float64)
    gamma = np.asarray(gamma, np.float64)
    beta = np.asarray(beta, np.float64)

    N, Cin, H, W = x.shape
    Cmid, kT = wT.shape[1], wT.shape[2]
    Cout, k2 = w2.shape[0], w2.shape[2]
    s = 2
    Ht, Wt = (H - 1) * s + kT, (W - 1) * s + kT

    # ConvTranspose2d(Cin, Cmid, k=4, stride=2, bias) -- scatter formulation.
    t = np.zeros((N, Cmid, Ht, Wt)) + bT[None, :, None, None]
    for i in range(H):
        for j in range(W):
            t[:, :, i * s:i * s + kT, j * s:j * s + kT] += np.einsum(
                'nc,cdpq->ndpq', x[:, :, i, j], wT)

    # ZeroPad2d(1) + Conv2d(Cmid, Cout, k=3, stride=1, bias).
    tp = np.pad(t, ((0, 0), (0, 0), (1, 1), (1, 1)))
    y = np.zeros((N, Cout, Ht, Wt)) + b2[None, :, None, None]
    for e in range(k2):
        for f in range(k2):
            y += np.einsum('ncpq,dc->ndpq',
                           tp[:, :, e:e + Ht, f:f + Wt], w2[:, :, e, f])

    # BatchNorm2d (training mode, biased batch statistics, affine) + ReLU.
    mean = y.mean(axis=(0, 2, 3), keepdims=True)
    var = y.var(axis=(0, 2, 3), keepdims=True)
    yn = ((y - mean) / np.sqrt(var + eps)
          * gamma[None, :, None, None] + beta[None, :, None, None])
    return np.maximum(yn, 0.0)


if __name__ == "__main__":
    key = jax.random.PRNGKey(0)
    kx, kwT, kbT, kw2, kb2, kg, kb = jax.random.split(key, 7)

    N, Cin, H, W = 2, 4, 16, 16
    Cout = 8

    x = jax.random.normal(kx, (N, Cin, H, W), jnp.float32)
    wT = jax.random.normal(kwT, (Cin, Cin, 4, 4), jnp.float32) * 0.2
    bT = jax.random.normal(kbT, (Cin,), jnp.float32) * 0.1
    w2 = jax.random.normal(kw2, (Cout, Cin, 3, 3), jnp.float32) * 0.2
    b2 = jax.random.normal(kb2, (Cout,), jnp.float32) * 0.1
    gamma = jax.random.uniform(kg, (Cout,), jnp.float32, 0.5, 1.5)
    beta = jax.random.normal(kb, (Cout,), jnp.float32) * 0.1

    fwd = jax.jit(conv_transpose_block_2d)
    out = jax.block_until_ready(fwd(x, wT, bT, w2, b2, gamma, beta))

    assert out.shape == (N, Cout, 2 * (H + 1), 2 * (W + 1)), out.shape

    ref = _reference_forward(x, wT, bT, w2, b2, gamma, beta)
    # Loose tolerance: default-precision MXU matmuls (single bf16 pass) plus a
    # bf16 intermediate; structural/index bugs would still show as O(1) errors.
    np.testing.assert_allclose(np.asarray(out), ref, rtol=5e-2, atol=5e-2)

    print("KERNEL_OK")
</pallas_src>

<mosaic_0001>
module attributes {stable_mosaic.version = 11 : i64} {
  func.func @_fused_convt_pad_conv_kernel(%arg0: i32, %arg1: memref<1x4x342xf32, #tpu.memory_space<vmem>>, %arg2: memref<4x4x16xf32, #tpu.memory_space<vmem>>, %arg3: memref<4x1xf32, #tpu.memory_space<vmem>>, %arg4: memref<4x8x64xf32, #tpu.memory_space<vmem>>, %arg5: memref<8x1xf32, #tpu.memory_space<vmem>>, %arg6: memref<1x321xf32, #tpu.memory_space<vmem>>, %arg7: memref<1x323xf32, #tpu.memory_space<vmem>>, %arg8: memref<1x4x8x323xbf16, #tpu.memory_space<vmem>>, %arg9: memref<1x8x1xf32, #tpu.memory_space<vmem>>, %arg10: memref<1x8x1xf32, #tpu.memory_space<vmem>>, %arg11: memref<4x4x363xf32, #tpu.memory_space<vmem>>) attributes {dimension_semantics = [#tpu.dimension_semantics<parallel>], iteration_bounds = array<i64: 2>, scalar_prefetch = 0 : i64, scratch_operands = 1 : i64, tpu.core_type = #tpu.core_type<tc>, window_params = [{transform_indices = @transform_0, window_bounds = array<i64: 1, 4, 342>}, {pipeline_mode = #tpu.pipeline_mode<synchronous>, transform_indices = @transform_1, window_bounds = array<i64: 4, 4, 16>}, {pipeline_mode = #tpu.pipeline_mode<synchronous>, transform_indices = @transform_2, window_bounds = array<i64: 4, 1>}, {pipeline_mode = #tpu.pipeline_mode<synchronous>, transform_indices = @transform_3, window_bounds = array<i64: 4, 8, 64>}, {pipeline_mode = #tpu.pipeline_mode<synchronous>, transform_indices = @transform_4, window_bounds = array<i64: 8, 1>}, {pipeline_mode = #tpu.pipeline_mode<synchronous>, transform_indices = @transform_5, window_bounds = array<i64: 1, 321>}, {pipeline_mode = #tpu.pipeline_mode<synchronous>, transform_indices = @transform_6, window_bounds = array<i64: 1, 323>}, {transform_indices = @transform_7, window_bounds = array<i64: 1, 4, 8, 323>}, {transform_indices = @transform_8, window_bounds = array<i64: 1, 8, 1>}, {transform_indices = @transform_9, window_bounds = array<i64: 1, 8, 1>}]} {
    %cst = arith.constant 0.000000e+00 : f32
    %0 = vector.broadcast %cst : f32 to vector<4x4x20xf32>
    %c0 = arith.constant 0 : index
    %c0_0 = arith.constant 0 : index
    %c0_1 = arith.constant 0 : index
    %1 = vector.load %arg11[%c0, %c0_0, %c0_1] : memref<4x4x363xf32, #tpu.memory_space<vmem>>, vector<4x4x20xf32>
    tpu.vector_store %arg11[%c0, %c0_0, %c0_1], %0 {strides = array<i32>} : memref<4x4x363xf32, #tpu.memory_space<vmem>>, vector<4x4x20xf32>,
    %cst_2 = arith.constant 0.000000e+00 : f32
    %2 = vector.broadcast %cst_2 : f32 to vector<4x4x22xf32>
    %c0_3 = arith.constant 0 : index
    %c0_4 = arith.constant 0 : index
    %c341 = arith.constant 341 : index
    %3 = vector.load %arg11[%c0_3, %c0_4, %c341] : memref<4x4x363xf32, #tpu.memory_space<vmem>>, vector<4x4x22xf32>
    tpu.vector_store %arg11[%c0_3, %c0_4, %c341], %2 {strides = array<i32>} : memref<4x4x363xf32, #tpu.memory_space<vmem>>, vector<4x4x22xf32>,
    %cst_5 = arith.constant 0.000000e+00 : f32
    %4 = vector.broadcast %cst_5 : f32 to vector<8x1xf32>
    %cst_6 = arith.constant 0.000000e+00 : f32
    %5 = vector.broadcast %cst_6 : f32 to vector<8x1xf32>
    %c0_7 = arith.constant 0 : index
    %c0_8 = arith.constant 0 : index
    %c0_9 = arith.constant 0 : index
    %6 = vector.load %arg1[%c0_7, %c0_8, %c0_9] : memref<1x4x342xf32, #tpu.memory_space<vmem>>, vector<1x4x321xf32>
    %7 = vector.shape_cast %6 : vector<1x4x321xf32> to vector<4x321xf32>
    %c0_10 = arith.constant 0 : index
    %c0_11 = arith.constant 0 : index
    %c1 = arith.constant 1 : index
    %8 = vector.load %arg1[%c0_10, %c0_11, %c1] : memref<1x4x342xf32, #tpu.memory_space<vmem>>, vector<1x4x321xf32>
    %9 = vector.shape_cast %8 : vector<1x4x321xf32> to vector<4x321xf32>
    %c0_12 = arith.constant 0 : index
    %c0_13 = arith.constant 0 : index
    %c19 = arith.constant 19 : index
    %10 = vector.load %arg1[%c0_12, %c0_13, %c19] : memref<1x4x342xf32, #tpu.memory_space<vmem>>, vector<1x4x321xf32>
    %11 = vector.shape_cast %10 : vector<1x4x321xf32> to vector<4x321xf32>
    %c0_14 = arith.constant 0 : index
    %c0_15 = arith.constant 0 : index
    %c20 = arith.constant 20 : index
    %12 = vector.load %arg1[%c0_14, %c0_15, %c20] : memref<1x4x342xf32, #tpu.memory_space<vmem>>, vector<1x4x321xf32>
    %13 = vector.shape_cast %12 : vector<1x4x321xf32> to vector<4x321xf32>
    %14 = tpu.concatenate %7, %9, %11, %13 in 0 : vector<4x321xf32>, vector<4x321xf32>, vector<4x321xf32>, vector<4x321xf32> -> vector<16x321xf32>
    %c0_16 = arith.constant 0 : index
    %c0_17 = arith.constant 0 : index
    %c0_18 = arith.constant 0 : index
    %15 = vector.load %arg2[%c0_16, %c0_17, %c0_18] : memref<4x4x16xf32, #tpu.memory_space<vmem>>, vector<1x4x16xf32>
    %16 = vector.shape_cast %15 : vector<1x4x16xf32> to vector<4x16xf32>
    %cst_19 = arith.constant dense<0.000000e+00> : vector<4x321xf32>
    %17 = tpu.matmul %16, %14, %cst_19 {dimension_numbers = #tpu.dot_dimension_numbers<[1], [0], [0], [1], [0, 0, 1, 1], [], []>} : vector<4x16xf32>, vector<16x321xf32>, vector<4x321xf32> -> vector<4x321xf32>
    %c0_20 = arith.constant 0 : index
    %c0_21 = arith.constant 0 : index
    %18 = vector.load %arg3[%c0_20, %c0_21] : memref<4x1xf32, #tpu.memory_space<vmem>>, vector<4x1xf32>
    %19 = vector.broadcast %18 : vector<4x1xf32> to vector<4x321xf32>
    %20 = arith.addf %17, %19 : vector<4x321xf32>
    %c0_22 = arith.constant 0 : index
    %c0_23 = arith.constant 0 : index
    %21 = vector.load %arg6[%c0_22, %c0_23] : memref<1x321xf32, #tpu.memory_space<vmem>>, vector<1x321xf32>
    %22 = vector.broadcast %21 : vector<1x321xf32> to vector<4x321xf32>
    %23 = arith.mulf %20, %22 : vector<4x321xf32>
    %c0_24 = arith.constant 0 : index
    %c0_25 = arith.constant 0 : index
    %c20_26 = arith.constant 20 : index
    %24 = vector.load %arg11[%c0_24, %c0_25, %c20_26] : memref<4x4x363xf32, #tpu.memory_space<vmem>>, vector<1x4x321xf32>
    %25 = vector.shape_cast %24 : vector<1x4x321xf32> to vector<4x321xf32>
    %26 = vector.shape_cast %23 : vector<4x321xf32> to vector<1x4x321xf32>
    tpu.vector_store %arg11[%c0_24, %c0_25, %c20_26], %26 {strides = array<i32>} : memref<4x4x363xf32, #tpu.memory_space<vmem>>, vector<1x4x321xf32>,
    %c1_27 = arith.constant 1 : index
    %c0_28 = arith.constant 0 : index
    %c0_29 = arith.constant 0 : index
    %27 = vector.load %arg2[%c1_27, %c0_28, %c0_29] : memref<4x4x16xf32, #tpu.memory_space<vmem>>, vector<1x4x16xf32>
    %28 = vector.shape_cast %27 : vector<1x4x16xf32> to vector<4x16xf32>
    %cst_30 = arith.constant dense<0.000000e+00> : vector<4x321xf32>
    %29 = tpu.matmul %28, %14, %cst_30 {dimension_numbers = #tpu.dot_dimension_numbers<[1], [0], [0], [1], [0, 0, 1, 1], [], []>} : vector<4x16xf32>, vector<16x321xf32>, vector<4x321xf32> -> vector<4x321xf32>
    %c0_31 = arith.constant 0 : index
    %c0_32 = arith.constant 0 : index
    %30 = vector.load %arg3[%c0_31, %c0_32] : memref<4x1xf32, #tpu.memory_space<vmem>>, vector<4x1xf32>
    %31 = vector.broadcast %30 : vector<4x1xf32> to vector<4x321xf32>
    %32 = arith.addf %29, %31 : vector<4x321xf32>
    %c0_33 = arith.constant 0 : index
    %c0_34 = arith.constant 0 : index
    %33 = vector.load %arg6[%c0_33, %c0_34] : memref<1x321xf32, #tpu.memory_space<vmem>>, vector<1x321xf32>
    %34 = vector.broadcast %33 : vector<1x321xf32> to vector<4x321xf32>
    %35 = arith.mulf %32, %34 : vector<4x321xf32>
    %c1_35 = arith.constant 1 : index
    %c0_36 = arith.constant 0 : index
    %c20_37 = arith.constant 20 : index
    %36 = vector.load %arg11[%c1_35, %c0_36, %c20_37] : memref<4x4x363xf32, #tpu.memory_space<vmem>>, vector<1x4x321xf32>
    %37 = vector.shape_cast %36 : vector<1x4x321xf32> to vector<4x321xf32>
    %38 = vector.shape_cast %35 : vector<4x321xf32> to vector<1x4x321xf32>
    tpu.vector_store %arg11[%c1_35, %c0_36, %c20_37], %38 {strides = array<i32>} : memref<4x4x363xf32, #tpu.memory_space<vmem>>, vector<1x4x321xf32>,
    %c2 = arith.constant 2 : index
    %c0_38 = arith.constant 0 : index
    %c0_39 = arith.constant 0 : index
    %39 = vector.load %arg2[%c2, %c0_38, %c0_39] : memref<4x4x16xf32, #tpu.memory_space<vmem>>, vector<1x4x16xf32>
    %40 = vector.shape_cast %39 : vector<1x4x16xf32> to vector<4x16xf32>
    %cst_40 = arith.constant dense<0.000000e+00> : vector<4x321xf32>
    %41 = tpu.matmul %40, %14, %cst_40 {dimension_numbers = #tpu.dot_dimension_numbers<[1], [0], [0], [1], [0, 0, 1, 1], [], []>} : vector<4x16xf32>, vector<16x321xf32>, vector<4x321xf32> -> vector<4x321xf32>
    %c0_41 = arith.constant 0 : index
    %c0_42 = arith.constant 0 : index
    %42 = vector.load %arg3[%c0_41, %c0_42] : memref<4x1xf32, #tpu.memory_space<vmem>>, vector<4x1xf32>
    %43 = vector.broadcast %42 : vector<4x1xf32> to vector<4x321xf32>
    %44 = arith.addf %41, %43 : vector<4x321xf32>
    %c0_43 = arith.constant 0 : index
    %c0_44 = arith.constant 0 : index
    %45 = vector.load %arg6[%c0_43, %c0_44] : memref<1x321xf32, #tpu.memory_space<vmem>>, vector<1x321xf32>
    %46 = vector.broadcast %45 : vector<1x321xf32> to vector<4x321xf32>
    %47 = arith.mulf %44, %46 : vector<4x321xf32>
    %c2_45 = arith.constant 2 : index
    %c0_46 = arith.constant 0 : index
    %c20_47 = arith.constant 20 : index
    %48 = vector.load %arg11[%c2_45, %c0_46, %c20_47] : memref<4x4x363xf32, #tpu.memory_space<vmem>>, vector<1x4x321xf32>
    %49 = vector.shape_cast %48 : vector<1x4x321xf32> to vector<4x321xf32>
    %50 = vector.shape_cast %47 : vector<4x321xf32> to vector<1x4x321xf32>
    tpu.vector_store %arg11[%c2_45, %c0_46, %c20_47], %50 {strides = array<i32>} : memref<4x4x363xf32, #tpu.memory_space<vmem>>, vector<1x4x321xf32>,
    %c3 = arith.constant 3 : index
    %c0_48 = arith.constant 0 : index
    %c0_49 = arith.constant 0 : index
    %51 = vector.load %arg2[%c3, %c0_48, %c0_49] : memref<4x4x16xf32, #tpu.memory_space<vmem>>, vector<1x4x16xf32>
    %52 = vector.shape_cast %51 : vector<1x4x16xf32> to vector<4x16xf32>
    %cst_50 = arith.constant dense<0.000000e+00> : vector<4x321xf32>
    %53 = tpu.matmul %52, %14, %cst_50 {dimension_numbers = #tpu.dot_dimension_numbers<[1], [0], [0], [1], [0, 0, 1, 1], [], []>} : vector<4x16xf32>, vector<16x321xf32>, vector<4x321xf32> -> vector<4x321xf32>
    %c0_51 = arith.constant 0 : index
    %c0_52 = arith.constant 0 : index
    %54 = vector.load %arg3[%c0_51, %c0_52] : memref<4x1xf32, #tpu.memory_space<vmem>>, vector<4x1xf32>
    %55 = vector.broadcast %54 : vector<4x1xf32> to vector<4x321xf32>
    %56 = arith.addf %53, %55 : vector<4x321xf32>
    %c0_53 = arith.constant 0 : index
    %c0_54 = arith.constant 0 : index
    %57 = vector.load %arg6[%c0_53, %c0_54] : memref<1x321xf32, #tpu.memory_space<vmem>>, vector<1x321xf32>
    %58 = vector.broadcast %57 : vector<1x321xf32> to vector<4x321xf32>
    %59 = arith.mulf %56, %58 : vector<4x321xf32>
    %c3_55 = arith.constant 3 : index
    %c0_56 = arith.constant 0 : index
    %c20_57 = arith.constant 20 : index
    %60 = vector.load %arg11[%c3_55, %c0_56, %c20_57] : memref<4x4x363xf32, #tpu.memory_space<vmem>>, vector<1x4x321xf32>
    %61 = vector.shape_cast %60 : vector<1x4x321xf32> to vector<4x321xf32>
    %62 = vector.shape_cast %59 : vector<4x321xf32> to vector<1x4x321xf32>
    tpu.vector_store %arg11[%c3_55, %c0_56, %c20_57], %62 {strides = array<i32>} : memref<4x4x363xf32, #tpu.memory_space<vmem>>, vector<1x4x321xf32>,
    %c3_58 = arith.constant 3 : index
    %c0_59 = arith.constant 0 : index
    %c0_60 = arith.constant 0 : index
    %63 = vector.load %arg11[%c3_58, %c0_59, %c0_60] : memref<4x4x363xf32, #tpu.memory_space<vmem>>, vector<1x4x323xf32>
    %64 = vector.shape_cast %63 : vector<1x4x323xf32> to vector<4x323xf32>
    %c2_61 = arith.constant 2 : index
    %c0_62 = arith.constant 0 : index
    %c1_63 = arith.constant 1 : index
    %65 = vector.load %arg11[%c2_61, %c0_62, %c1_63] : memref<4x4x363xf32, #tpu.memory_space<vmem>>, vector<1x4x323xf32>
    %66 = vector.shape_cast %65 : vector<1x4x323xf32> to vector<4x323xf32>
    %c3_64 = arith.constant 3 : index
    %c0_65 = arith.constant 0 : index
    %c1_66 = arith.constant 1 : index
    %67 = vector.load %arg11[%c3_64, %c0_65, %c1_66] : memref<4x4x363xf32, #tpu.memory_space<vmem>>, vector<1x4x323xf32>
    %68 = vector.shape_cast %67 : vector<1x4x323xf32> to vector<4x323xf32>
    %c2_67 = arith.constant 2 : index
    %c0_68 = arith.constant 0 : index
    %c2_69 = arith.constant 2 : index
    %69 = vector.load %arg11[%c2_67, %c0_68, %c2_69] : memref<4x4x363xf32, #tpu.memory_space<vmem>>, vector<1x4x323xf32>
    %70 = vector.shape_cast %69 : vector<1x4x323xf32> to vector<4x323xf32>
    %c1_70 = arith.constant 1 : index
    %c0_71 = arith.constant 0 : index
    %c19_72 = arith.constant 19 : index
    %71 = vector.load %arg11[%c1_70, %c0_71, %c19_72] : memref<4x4x363xf32, #tpu.memory_space<vmem>>, vector<1x4x323xf32>
    %72 = vector.shape_cast %71 : vector<1x4x323xf32> to vector<4x323xf32>
    %c0_73 = arith.constant 0 : index
    %c0_74 = arith.constant 0 : index
    %c20_75 = arith.constant 20 : index
    %73 = vector.load %arg11[%c0_73, %c0_74, %c20_75] : memref<4x4x363xf32, #tpu.memory_space<vmem>>, vector<1x4x323xf32>
    %74 = vector.shape_cast %73 : vector<1x4x323xf32> to vector<4x323xf32>
    %c1_76 = arith.constant 1 : index
    %c0_77 = arith.constant 0 : index
    %c20_78 = arith.constant 20 : index
    %75 = vector.load %arg11[%c1_76, %c0_77, %c20_78] : memref<4x4x363xf32, #tpu.memory_space<vmem>>, vector<1x4x323xf32>
    %76 = vector.shape_cast %75 : vector<1x4x323xf32> to vector<4x323xf32>
    %c0_79 = arith.constant 0 : index
    %c0_80 = arith.constant 0 : index
    %c21 = arith.constant 21 : index
    %77 = vector.load %arg11[%c0_79, %c0_80, %c21] : memref<4x4x363xf32, #tpu.memory_space<vmem>>, vector<1x4x323xf32>
    %78 = vector.shape_cast %77 : vector<1x4x323xf32> to vector<4x323xf32>
    %c3_81 = arith.constant 3 : index
    %c0_82 = arith.constant 0 : index
    %c19_83 = arith.constant 19 : index
    %79 = vector.load %arg11[%c3_81, %c0_82, %c19_83] : memref<4x4x363xf32, #tpu.memory_space<vmem>>, vector<1x4x323xf32>
    %80 = vector.shape_cast %79 : vector<1x4x323xf32> to vector<4x323xf32>
    %c2_84 = arith.constant 2 : index
    %c0_85 = arith.constant 0 : index
    %c20_86 = arith.constant 20 : index
    %81 = vector.load %arg11[%c2_84, %c0_85, %c20_86] : memref<4x4x363xf32, #tpu.memory_space<vmem>>, vector<1x4x323xf32>
    %82 = vector.shape_cast %81 : vector<1x4x323xf32> to vector<4x323xf32>
    %c3_87 = arith.constant 3 : index
    %c0_88 = arith.constant 0 : index
    %c20_89 = arith.constant 20 : index
    %83 = vector.load %arg11[%c3_87, %c0_88, %c20_89] : memref<4x4x363xf32, #tpu.memory_space<vmem>>, vector<1x4x323xf32>
    %84 = vector.shape_cast %83 : vector<1x4x323xf32> to vector<4x323xf32>
    %c2_90 = arith.constant 2 : index
    %c0_91 = arith.constant 0 : index
    %c21_92 = arith.constant 21 : index
    %85 = vector.load %arg11[%c2_90, %c0_91, %c21_92] : memref<4x4x363xf32, #tpu.memory_space<vmem>>, vector<1x4x323xf32>
    %86 = vector.shape_cast %85 : vector<1x4x323xf32> to vector<4x323xf32>
    %c1_93 = arith.constant 1 : index
    %c0_94 = arith.constant 0 : index
    %c38 = arith.constant 38 : index
    %87 = vector.load %arg11[%c1_93, %c0_94, %c38] : memref<4x4x363xf32, #tpu.memory_space<vmem>>, vector<1x4x323xf32>
    %88 = vector.shape_cast %87 : vector<1x4x323xf32> to vector<4x323xf32>
    %c0_95 = arith.constant 0 : index
    %c0_96 = arith.constant 0 : index
    %c39 = arith.constant 39 : index
    %89 = vector.load %arg11[%c0_95, %c0_96, %c39] : memref<4x4x363xf32, #tpu.memory_space<vmem>>, vector<1x4x323xf32>
    %90 = vector.shape_cast %89 : vector<1x4x323xf32> to vector<4x323xf32>
    %c1_97 = arith.constant 1 : index
    %c0_98 = arith.constant 0 : index
    %c39_99 = arith.constant 39 : index
    %91 = vector.load %arg11[%c1_97, %c0_98, %c39_99] : memref<4x4x363xf32, #tpu.memory_space<vmem>>, vector<1x4x323xf32>
    %92 = vector.shape_cast %91 : vector<1x4x323xf32> to vector<4x323xf32>
    %c0_100 = arith.constant 0 : index
    %c0_101 = arith.constant 0 : index
    %c40 = arith.constant 40 : index
    %93 = vector.load %arg11[%c0_100, %c0_101, %c40] : memref<4x4x363xf32, #tpu.memory_space<vmem>>, vector<1x4x323xf32>
    %94 = vector.shape_cast %93 : vector<1x4x323xf32> to vector<4x323xf32>
    %95 = tpu.concatenate %64, %66, %68, %70, %72, %74, %76, %78, %80, %82, %84, %86, %88, %90, %92, %94 in 0 : vector<4x323xf32>, vector<4x323xf32>, vector<4x323xf32>, vector<4x323xf32>, vector<4x323xf32>, vector<4x323xf32>, vector<4x323xf32>, vector<4x323xf32>, vector<4x323xf32>, vector<4x323xf32>, vector<4x323xf32>, vector<4x323xf32>, vector<4x323xf32>, vector<4x323xf32>, vector<4x323xf32>, vector<4x323xf32> -> vector<64x323xf32>
    %c0_102 = arith.constant 0 : index
    %c0_103 = arith.constant 0 : index
    %c0_104 = arith.constant 0 : index
    %96 = vector.load %arg4[%c0_102, %c0_103, %c0_104] : memref<4x8x64xf32, #tpu.memory_space<vmem>>, vector<1x8x64xf32>
    %97 = vector.shape_cast %96 : vector<1x8x64xf32> to vector<8x64xf32>
    %cst_105 = arith.constant dense<0.000000e+00> : vector<8x323xf32>
    %98 = tpu.matmul %97, %95, %cst_105 {dimension_numbers = #tpu.dot_dimension_numbers<[1], [0], [0], [1], [0, 0, 1, 1], [], []>} : vector<8x64xf32>, vector<64x323xf32>, vector<8x323xf32> -> vector<8x323xf32>
    %c0_106 = arith.constant 0 : index
    %c0_107 = arith.constant 0 : index
    %99 = vector.load %arg5[%c0_106, %c0_107] : memref<8x1xf32, #tpu.memory_space<vmem>>, vector<8x1xf32>
    %100 = vector.broadcast %99 : vector<8x1xf32> to vector<8x323xf32>
    %101 = arith.addf %98, %100 : vector<8x323xf32>
    %102 = arith.truncf %101 : vector<8x323xf32> to vector<8x323xbf16>
    %c0_108 = arith.constant 0 : index
    %c0_109 = arith.constant 0 : index
    %c0_110 = arith.constant 0 : index
    %c0_111 = arith.constant 0 : index
    %103 = vector.load %arg8[%c0_108, %c0_109, %c0_110, %c0_111] : memref<1x4x8x323xbf16, #tpu.memory_space<vmem>>, vector<1x1x8x323xbf16>
    %104 = vector.shape_cast %103 : vector<1x1x8x323xbf16> to vector<8x323xbf16>
    %105 = vector.shape_cast %102 : vector<8x323xbf16> to vector<1x1x8x323xbf16>
    tpu.vector_store %arg8[%c0_108, %c0_109, %c0_110, %c0_111], %105 {strides = array<i32>} : memref<1x4x8x323xbf16, #tpu.memory_space<vmem>>, vector<1x1x8x323xbf16>,
    %c0_112 = arith.constant 0 : index
    %c0_113 = arith.constant 0 : index
    %106 = vector.load %arg7[%c0_112, %c0_113] : memref<1x323xf32, #tpu.memory_space<vmem>>, vector<1x323xf32>
    %107 = vector.broadcast %106 : vector<1x323xf32> to vector<8x323xf32>
    %108 = arith.mulf %101, %107 : vector<8x323xf32>
    %cst_114 = arith.constant dense<0.000000e+00> : vector<8xf32>
    %109 = vector.multi_reduction <add>, %108, %cst_114 [1] : vector<8x323xf32> to vector<8xf32>
    %110 = vector.shape_cast %109 : vector<8xf32> to vector<8x1xf32>
    %111 = arith.addf %4, %110 : vector<8x1xf32>
    %112 = arith.mulf %108, %101 : vector<8x323xf32>
    %cst_115 = arith.constant dense<0.000000e+00> : vector<8xf32>
    %113 = vector.multi_reduction <add>, %112, %cst_115 [1] : vector<8x323xf32> to vector<8xf32>
    %114 = vector.shape_cast %113 : vector<8xf32> to vector<8x1xf32>
    %115 = arith.addf %5, %114 : vector<8x1xf32>
    %c1_116 = arith.constant 1 : index
    %c0_117 = arith.constant 0 : index
    %c0_118 = arith.constant 0 : index
    %116 = vector.load %arg4[%c1_116, %c0_117, %c0_118] : memref<4x8x64xf32, #tpu.memory_space<vmem>>, vector<1x8x64xf32>
    %117 = vector.shape_cast %116 : vector<1x8x64xf32> to vector<8x64xf32>
    %cst_119 = arith.constant dense<0.000000e+00> : vector<8x323xf32>
    %118 = tpu.matmul %117, %95, %cst_119 {dimension_numbers = #tpu.dot_dimension_numbers<[1], [0], [0], [1], [0, 0, 1, 1], [], []>} : vector<8x64xf32>, vector<64x323xf32>, vector<8x323xf32> -> vector<8x323xf32>
    %c0_120 = arith.constant 0 : index
    %c0_121 = arith.constant 0 : index
    %119 = vector.load %arg5[%c0_120, %c0_121] : memref<8x1xf32, #tpu.memory_space<vmem>>, vector<8x1xf32>
    %120 = vector.broadcast %119 : vector<8x1xf32> to vector<8x323xf32>
    %121 = arith.addf %118, %120 : vector<8x323xf32>
    %122 = arith.truncf %121 : vector<8x323xf32> to vector<8x323xbf16>
    %c0_122 = arith.constant 0 : index
    %c1_123 = arith.constant 1 : index
    %c0_124 = arith.constant 0 : index
    %c0_125 = arith.constant 0 : index
    %123 = vector.load %arg8[%c0_122, %c1_123, %c0_124, %c0_125] : memref<1x4x8x323xbf16, #tpu.memory_space<vmem>>, vector<1x1x8x323xbf16>
    %124 = vector.shape_cast %123 : vector<1x1x8x323xbf16> to vector<8x323xbf16>
    %125 = vector.shape_cast %122 : vector<8x323xbf16> to vector<1x1x8x323xbf16>
    tpu.vector_store %arg8[%c0_122, %c1_123, %c0_124, %c0_125], %125 {strides = array<i32>} : memref<1x4x8x323xbf16, #tpu.memory_space<vmem>>, vector<1x1x8x323xbf16>,
    %c0_126 = arith.constant 0 : index
    %c0_127 = arith.constant 0 : index
    %126 = vector.load %arg7[%c0_126, %c0_127] : memref<1x323xf32, #tpu.memory_space<vmem>>, vector<1x323xf32>
    %127 = vector.broadcast %126 : vector<1x323xf32> to vector<8x323xf32>
    %128 = arith.mulf %121, %127 : vector<8x323xf32>
    %cst_128 = arith.constant dense<0.000000e+00> : vector<8xf32>
    %129 = vector.multi_reduction <add>, %128, %cst_128 [1] : vector<8x323xf32> to vector<8xf32>
    %130 = vector.shape_cast %129 : vector<8xf32> to vector<8x1xf32>
    %131 = arith.addf %111, %130 : vector<8x1xf32>
    %132 = arith.mulf %128, %121 : vector<8x323xf32>
    %cst_129 = arith.constant dense<0.000000e+00> : vector<8xf32>
    %133 = vector.multi_reduction <add>, %132, %cst_129 [1] : vector<8x323xf32> to vector<8xf32>
    %134 = vector.shape_cast %133 : vector<8xf32> to vector<8x1xf32>
    %135 = arith.addf %115, %134 : vector<8x1xf32>
    %c2_130 = arith.constant 2 : index
    %c0_131 = arith.constant 0 : index
    %c0_132 = arith.constant 0 : index
    %136 = vector.load %arg4[%c2_130, %c0_131, %c0_132] : memref<4x8x64xf32, #tpu.memory_space<vmem>>, vector<1x8x64xf32>
    %137 = vector.shape_cast %136 : vector<1x8x64xf32> to vector<8x64xf32>
    %cst_133 = arith.constant dense<0.000000e+00> : vector<8x323xf32>
    %138 = tpu.matmul %137, %95, %cst_133 {dimension_numbers = #tpu.dot_dimension_numbers<[1], [0], [0], [1], [0, 0, 1, 1], [], []>} : vector<8x64xf32>, vector<64x323xf32>, vector<8x323xf32> -> vector<8x323xf32>
    %c0_134 = arith.constant 0 : index
    %c0_135 = arith.constant 0 : index
    %139 = vector.load %arg5[%c0_134, %c0_135] : memref<8x1xf32, #tpu.memory_space<vmem>>, vector<8x1xf32>
    %140 = vector.broadcast %139 : vector<8x1xf32> to vector<8x323xf32>
    %141 = arith.addf %138, %140 : vector<8x323xf32>
    %142 = arith.truncf %141 : vector<8x323xf32> to vector<8x323xbf16>
    %c0_136 = arith.constant 0 : index
    %c2_137 = arith.constant 2 : index
    %c0_138 = arith.constant 0 : index
    %c0_139 = arith.constant 0 : index
    %143 = vector.load %arg8[%c0_136, %c2_137, %c0_138, %c0_139] : memref<1x4x8x323xbf16, #tpu.memory_space<vmem>>, vector<1x1x8x323xbf16>
    %144 = vector.shape_cast %143 : vector<1x1x8x323xbf16> to vector<8x323xbf16>
    %145 = vector.shape_cast %142 : vector<8x323xbf16> to vector<1x1x8x323xbf16>
    tpu.vector_store %arg8[%c0_136, %c2_137, %c0_138, %c0_139], %145 {strides = array<i32>} : memref<1x4x8x323xbf16, #tpu.memory_space<vmem>>, vector<1x1x8x323xbf16>,
    %c0_140 = arith.constant 0 : index
    %c0_141 = arith.constant 0 : index
    %146 = vector.load %arg7[%c0_140, %c0_141] : memref<1x323xf32, #tpu.memory_space<vmem>>, vector<1x323xf32>
    %147 = vector.broadcast %146 : vector<1x323xf32> to vector<8x323xf32>
    %148 = arith.mulf %141, %147 : vector<8x323xf32>
    %cst_142 = arith.constant dense<0.000000e+00> : vector<8xf32>
    %149 = vector.multi_reduction <add>, %148, %cst_142 [1] : vector<8x323xf32> to vector<8xf32>
    %150 = vector.shape_cast %149 : vector<8xf32> to vector<8x1xf32>
    %151 = arith.addf %131, %150 : vector<8x1xf32>
    %152 = arith.mulf %148, %141 : vector<8x323xf32>
    %cst_143 = arith.constant dense<0.000000e+00> : vector<8xf32>
    %153 = vector.multi_reduction <add>, %152, %cst_143 [1] : vector<8x323xf32> to vector<8xf32>
    %154 = vector.shape_cast %153 : vector<8xf32> to vector<8x1xf32>
    %155 = arith.addf %135, %154 : vector<8x1xf32>
    %c3_144 = arith.constant 3 : index
    %c0_145 = arith.constant 0 : index
    %c0_146 = arith.constant 0 : index
    %156 = vector.load %arg4[%c3_144, %c0_145, %c0_146] : memref<4x8x64xf32, #tpu.memory_space<vmem>>, vector<1x8x64xf32>
    %157 = vector.shape_cast %156 : vector<1x8x64xf32> to vector<8x64xf32>
    %cst_147 = arith.constant dense<0.000000e+00> : vector<8x323xf32>
    %158 = tpu.matmul %157, %95, %cst_147 {dimension_numbers = #tpu.dot_dimension_numbers<[1], [0], [0], [1], [0, 0, 1, 1], [], []>} : vector<8x64xf32>, vector<64x323xf32>, vector<8x323xf32> -> vector<8x323xf32>
    %c0_148 = arith.constant 0 : index
    %c0_149 = arith.constant 0 : index
    %159 = vector.load %arg5[%c0_148, %c0_149] : memref<8x1xf32, #tpu.memory_space<vmem>>, vector<8x1xf32>
    %160 = vector.broadcast %159 : vector<8x1xf32> to vector<8x323xf32>
    %161 = arith.addf %158, %160 : vector<8x323xf32>
    %162 = arith.truncf %161 : vector<8x323xf32> to vector<8x323xbf16>
    %c0_150 = arith.constant 0 : index
    %c3_151 = arith.constant 3 : index
    %c0_152 = arith.constant 0 : index
    %c0_153 = arith.constant 0 : index
    %163 = vector.load %arg8[%c0_150, %c3_151, %c0_152, %c0_153] : memref<1x4x8x323xbf16, #tpu.memory_space<vmem>>, vector<1x1x8x323xbf16>
    %164 = vector.shape_cast %163 : vector<1x1x8x323xbf16> to vector<8x323xbf16>
    %165 = vector.shape_cast %162 : vector<8x323xbf16> to vector<1x1x8x323xbf16>
    tpu.vector_store %arg8[%c0_150, %c3_151, %c0_152, %c0_153], %165 {strides = array<i32>} : memref<1x4x8x323xbf16, #tpu.memory_space<vmem>>, vector<1x1x8x323xbf16>,
    %c0_154 = arith.constant 0 : index
    %c0_155 = arith.constant 0 : index
    %166 = vector.load %arg7[%c0_154, %c0_155] : memref<1x323xf32, #tpu.memory_space<vmem>>, vector<1x323xf32>
    %167 = vector.broadcast %166 : vector<1x323xf32> to vector<8x323xf32>
    %168 = arith.mulf %161, %167 : vector<8x323xf32>
    %cst_156 = arith.constant dense<0.000000e+00> : vector<8xf32>
    %169 = vector.multi_reduction <add>, %168, %cst_156 [1] : vector<8x323xf32> to vector<8xf32>
    %170 = vector.shape_cast %169 : vector<8xf32> to vector<8x1xf32>
    %171 = arith.addf %151, %170 : vector<8x1xf32>
    %172 = arith.mulf %168, %161 : vector<8x323xf32>
    %cst_157 = arith.constant dense<0.000000e+00> : vector<8xf32>
    %173 = vector.multi_reduction <add>, %172, %cst_157 [1] : vector<8x323xf32> to vector<8xf32>
    %174 = vector.shape_cast %173 : vector<8xf32> to vector<8x1xf32>
    %175 = arith.addf %155, %174 : vector<8x1xf32>
    %c0_158 = arith.constant 0 : index
    %c0_159 = arith.constant 0 : index
    %c0_160 = arith.constant 0 : index
    %176 = vector.load %arg9[%c0_158, %c0_159, %c0_160] : memref<1x8x1xf32, #tpu.memory_space<vmem>>, vector<1x8x1xf32>
    %177 = vector.shape_cast %176 : vector<1x8x1xf32> to vector<8x1xf32>
    %178 = vector.shape_cast %171 : vector<8x1xf32> to vector<1x8x1xf32>
    tpu.vector_store %arg9[%c0_158, %c0_159, %c0_160], %178 {strides = array<i32>} : memref<1x8x1xf32, #tpu.memory_space<vmem>>, vector<1x8x1xf32>,
    %c0_161 = arith.constant 0 : index
    %c0_162 = arith.constant 0 : index
    %c0_163 = arith.constant 0 : index
    %179 = vector.load %arg10[%c0_161, %c0_162, %c0_163] : memref<1x8x1xf32, #tpu.memory_space<vmem>>, vector<1x8x1xf32>
    %180 = vector.shape_cast %179 : vector<1x8x1xf32> to vector<8x1xf32>
    %181 = vector.shape_cast %175 : vector<8x1xf32> to vector<1x8x1xf32>
    tpu.vector_store %arg10[%c0_161, %c0_162, %c0_163], %181 {strides = array<i32>} : memref<1x8x1xf32, #tpu.memory_space<vmem>>, vector<1x8x1xf32>,
    return
  }
  func.func @transform_0(%arg0: i32) -> (i32, i32, i32) {
    %c0_i32 = arith.constant 0 : i32
    %c0_i32_0 = arith.constant 0 : i32
    %c0_i32_1 = arith.constant 0 : i32
    return %arg0, %c0_i32, %c0_i32_0 : i32, i32, i32
  }
  func.func @transform_1(%arg0: i32) -> (i32, i32, i32) {
    %c0_i32 = arith.constant 0 : i32
    %c0_i32_0 = arith.constant 0 : i32
    %c0_i32_1 = arith.constant 0 : i32
    %c0_i32_2 = arith.constant 0 : i32
    return %c0_i32, %c0_i32_0, %c0_i32_1 : i32, i32, i32
  }
  func.func @transform_2(%arg0: i32) -> (i32, i32) {
    %c0_i32 = arith.constant 0 : i32
    %c0_i32_0 = arith.constant 0 : i32
    %c0_i32_1 = arith.constant 0 : i32
    return %c0_i32, %c0_i32_0 : i32, i32
  }
  func.func @transform_3(%arg0: i32) -> (i32, i32, i32) {
    %c0_i32 = arith.constant 0 : i32
    %c0_i32_0 = arith.constant 0 : i32
    %c0_i32_1 = arith.constant 0 : i32
    %c0_i32_2 = arith.constant 0 : i32
    return %c0_i32, %c0_i32_0, %c0_i32_1 : i32, i32, i32
  }
  func.func @transform_4(%arg0: i32) -> (i32, i32) {
    %c0_i32 = arith.constant 0 : i32
    %c0_i32_0 = arith.constant 0 : i32
    %c0_i32_1 = arith.constant 0 : i32
    return %c0_i32, %c0_i32_0 : i32, i32
  }
  func.func @transform_5(%arg0: i32) -> (i32, i32) {
    %c0_i32 = arith.constant 0 : i32
    %c0_i32_0 = arith.constant 0 : i32
    %c0_i32_1 = arith.constant 0 : i32
    return %c0_i32, %c0_i32_0 : i32, i32
  }
  func.func @transform_6(%arg0: i32) -> (i32, i32) {
    %c0_i32 = arith.constant 0 : i32
    %c0_i32_0 = arith.constant 0 : i32
    %c0_i32_1 = arith.constant 0 : i32
    return %c0_i32, %c0_i32_0 : i32, i32
  }
  func.func @transform_7(%arg0: i32) -> (i32, i32, i32, i32) {
    %c0_i32 = arith.constant 0 : i32
    %c0_i32_0 = arith.constant 0 : i32
    %c0_i32_1 = arith.constant 0 : i32
    %c0_i32_2 = arith.constant 0 : i32
    return %arg0, %c0_i32, %c0_i32_0, %c0_i32_1 : i32, i32, i32, i32
  }
  func.func @transform_8(%arg0: i32) -> (i32, i32, i32) {
    %c0_i32 = arith.constant 0 : i32
    %c0_i32_0 = arith.constant 0 : i32
    %c0_i32_1 = arith.constant 0 : i32
    return %arg0, %c0_i32, %c0_i32_0 : i32, i32, i32
  }
  func.func @transform_9(%arg0: i32) -> (i32, i32, i32) {
    %c0_i32 = arith.constant 0 : i32
    %c0_i32_0 = arith.constant 0 : i32
    %c0_i32_1 = arith.constant 0 : i32
    return %arg0, %c0_i32, %c0_i32_0 : i32, i32, i32
  }
}

</mosaic_0001>

<llo_original>
// kernel: conv_transpose_block_2d.1
$region0: #{conv_transpose_block_2d.1}
  #allocation0 [shape = 'u32[]', space=smem, size = 0x4, offset = 0x4, fixed_abs, tag = 'smem constant byte address 0x4 - core index']
  #allocation1 [shape = 'u32[144,128]{1,0:T(1,128)}', space=vmem, size = 0x12000, scoped, tag = 'internal scratch']
  #allocation2 [shape = 'f32[4,4,363]{2,1,0:T(4,128)}', space=vmem, size = 0x6000, scoped, tag = 'scratch operand']
  %s0 = inlined_call_operand.vmem [shape: f32[2,4,342], index: 0, kind: input, shape index: {}]
  %s1 = inlined_call_operand.vmem [shape: f32[4,4,16], index: 1, kind: input, shape index: {}]
  %s2 = inlined_call_operand.vmem [shape: f32[4,1], index: 2, kind: input, shape index: {}]
  %s3 = inlined_call_operand.vmem [shape: f32[4,8,64], index: 3, kind: input, shape index: {}]
  %s4 = inlined_call_operand.vmem [shape: f32[8,1], index: 4, kind: input, shape index: {}]
  %s5 = inlined_call_operand.vmem [shape: f32[1,321], index: 5, kind: input, shape index: {}]
  %s6 = inlined_call_operand.vmem [shape: f32[1,323], index: 6, kind: input, shape index: {}]
  %s7 = inlined_call_operand.vmem [shape: bf16[2,4,8,323], index: 7, kind: output, shape index: {0}]
  %s8 = inlined_call_operand.vmem [shape: f32[2,8,1], index: 8, kind: output, shape index: {1}]
  %s9 = inlined_call_operand.vmem [shape: f32[2,8,1], index: 9, kind: output, shape index: {2}]
  %10 = xla_tuple %s7, %s8, %s9
  %s11 = sld [smem:[#allocation0]]
  $region77: #{conv_transpose_block_2d.1} parent=0
    _
  %s13 = ssub.s32 1, %s11
  %s14 = scalar_select 0, %s13, %s11
  loop: start=0, step=1, limit=4
  $region2: #{conv_transpose_block_2d.1} parent=0 // loop_pre_header
    _
  $region3: #{conv_transpose_block_2d.1} parent=0 // loop_header
    %s16 = sphi 0, %s20
    %p17 = scmp.ge.s32.totalorder %s16, 4
    %s26 = sphi 0, %s28
    %s29 = sphi 0, %s26
    %s30 = sphi 0, %s29
    %s46 = sphi 0, %s30
    %s50 = sphi 0, %s50
    %s52 = sphi 0, %s50
    %s53 = sphi 0, %s52
    %s67 = sphi 0, %s53
    %s71 = sphi 0, %s71
    %s73 = sphi 0, %s71
    %s74 = sphi 0, %s73
    %s88 = sphi 0, %s74
    %s92 = sphi 0, %s92
    %s94 = sphi 0, %s92
    %s95 = sphi 0, %s94
    %s109 = sphi 0, %s95
    %s113 = sphi 0, %s113
    %s115 = sphi 0, %s113
    %s116 = sphi 0, %s115
    %s130 = sphi 0, %s116
    %s134 = sphi 0, %s134
    %s136 = sphi 0, %s134
    %s137 = sphi 0, %s136
    %s151 = sphi 0, %s137
    %s155 = sphi 0, %s155
    %s157 = sphi 0, %s155
    %s158 = sphi 0, %s157
    %s172 = sphi 0, %s158
    %s178 = sphi 0, %s180
    %s181 = sphi 0, %s178
    %s182 = sphi 0, %s181
    %s198 = sphi 0, %s182
    %s204 = sphi 0, %s206
    %s207 = sphi 0, %s204
    %s208 = sphi 0, %s207
    %s224 = sphi 0, %s208
    %s230 = sphi 0, %s232
    %s233 = sphi 0, %s230
    %s234 = sphi 0, %s233
    %s250 = sphi 0, %s234
  $region4: #{conv_transpose_block_2d.1} parent=0 // loop_header_branch
    %19 = sbr.rel (%p17) target = $region8
  $region5: #{conv_transpose_block_2d.1} parent=0 // loop_body
    %s21 = ssub.s32 %s16, 1
    %s22 = ssub.s32 %s16, 2
    %s23 = sadd.s32 %s16, 1
    %s24 = ssub.s32 %s16, %s23
    %p25 = scmp.eq.s32.totalorder %s24, 0
    %s27 = sadd.s32 %s26, 1
    %s28 = scalar_select %p25, %s26, %s27
    %p31 = pneg %p25
    %p32 = scmp.eq.s32.totalorder %s16, 1
    %p33 = por %p31, %p32
    %p34 = scmp.ne.s32.totalorder %s26, %s29
    %p35 = scmp.eq.s32.totalorder %s16, 0
    %p36 = por %p34, %p35
    %p37 = scmp.ne.s32.totalorder %s26, %s29
    %p38 = scmp.eq.s32.totalorder %s21, 1
    %p39 = por %p37, %p38
    %p40 = scmp.ne.s32.totalorder %s29, %s30
    %p41 = scmp.eq.s32.totalorder %s21, 0
    %p42 = por %p40, %p41
    %p43 = scmp.ne.s32.totalorder %s29, %s30
    %p44 = scmp.eq.s32.totalorder %s22, 1
    %p45 = por %p43, %p44
    %p47 = scmp.ne.s32.totalorder %s30, %s46
    %p48 = scmp.eq.s32.totalorder %s22, 0
    %p49 = por %p47, %p48
    %s51 = sadd.s32 %s50, 1
    %p54 = scmp.eq.s32.totalorder %s16, 1
    %p55 = scmp.ne.s32.totalorder %s50, %s52
    %p56 = scmp.eq.s32.totalorder %s16, 0
    %p57 = por %p55, %p56
    %p58 = scmp.ne.s32.totalorder %s50, %s52
    %p59 = scmp.eq.s32.totalorder %s21, 1
    %p60 = por %p58, %p59
    %p61 = scmp.ne.s32.totalorder %s52, %s53
    %p62 = scmp.eq.s32.totalorder %s21, 0
    %p63 = por %p61, %p62
    %p64 = scmp.ne.s32.totalorder %s52, %s53
    %p65 = scmp.eq.s32.totalorder %s22, 1
    %p66 = por %p64, %p65
    %p68 = scmp.ne.s32.totalorder %s53, %s67
    %p69 = scmp.eq.s32.totalorder %s22, 0
    %p70 = por %p68, %p69
    %s72 = sadd.s32 %s71, 1
    %p75 = scmp.eq.s32.totalorder %s16, 1
    %p76 = scmp.ne.s32.totalorder %s71, %s73
    %p77 = scmp.eq.s32.totalorder %s16, 0
    %p78 = por %p76, %p77
    %p79 = scmp.ne.s32.totalorder %s71, %s73
    %p80 = scmp.eq.s32.totalorder %s21, 1
    %p81 = por %p79, %p80
    %p82 = scmp.ne.s32.totalorder %s73, %s74
    %p83 = scmp.eq.s32.totalorder %s21, 0
    %p84 = por %p82, %p83
    %p85 = scmp.ne.s32.totalorder %s73, %s74
    %p86 = scmp.eq.s32.totalorder %s22, 1
    %p87 = por %p85, %p86
    %p89 = scmp.ne.s32.totalorder %s74, %s88
    %p90 = scmp.eq.s32.totalorder %s22, 0
    %p91 = por %p89, %p90
    %s93 = sadd.s32 %s92, 1
    %p96 = scmp.eq.s32.totalorder %s16, 1
    %p97 = scmp.ne.s32.totalorder %s92, %s94
    %p98 = scmp.eq.s32.totalorder %s16, 0
    %p99 = por %p97, %p98
    %p100 = scmp.ne.s32.totalorder %s92, %s94
    %p101 = scmp.eq.s32.totalorder %s21, 1
    %p102 = por %p100, %p101
    %p103 = scmp.ne.s32.totalorder %s94, %s95
    %p104 = scmp.eq.s32.totalorder %s21, 0
    %p105 = por %p103, %p104
    %p106 = scmp.ne.s32.totalorder %s94, %s95
    %p107 = scmp.eq.s32.totalorder %s22, 1
    %p108 = por %p106, %p107
    %p110 = scmp.ne.s32.totalorder %s95, %s109
    %p111 = scmp.eq.s32.totalorder %s22, 0
    %p112 = por %p110, %p111
    %s114 = sadd.s32 %s113, 1
    %p117 = scmp.eq.s32.totalorder %s16, 1
    %p118 = scmp.ne.s32.totalorder %s113, %s115
    %p119 = scmp.eq.s32.totalorder %s16, 0
    %p120 = por %p118, %p119
    %p121 = scmp.ne.s32.totalorder %s113, %s115
    %p122 = scmp.eq.s32.totalorder %s21, 1
    %p123 = por %p121, %p122
    %p124 = scmp.ne.s32.totalorder %s115, %s116
    %p125 = scmp.eq.s32.totalorder %s21, 0
    %p126 = por %p124, %p125
    %p127 = scmp.ne.s32.totalorder %s115, %s116
    %p128 = scmp.eq.s32.totalorder %s22, 1
    %p129 = por %p127, %p128
    %p131 = scmp.ne.s32.totalorder %s116, %s130
    %p132 = scmp.eq.s32.totalorder %s22, 0
    %p133 = por %p131, %p132
    %s135 = sadd.s32 %s134, 1
    %p138 = scmp.eq.s32.totalorder %s16, 1
    %p139 = scmp.ne.s32.totalorder %s134, %s136
    %p140 = scmp.eq.s32.totalorder %s16, 0
    %p141 = por %p139, %p140
    %p142 = scmp.ne.s32.totalorder %s134, %s136
    %p143 = scmp.eq.s32.totalorder %s21, 1
    %p144 = por %p142, %p143
    %p145 = scmp.ne.s32.totalorder %s136, %s137
    %p146 = scmp.eq.s32.totalorder %s21, 0
    %p147 = por %p145, %p146
    %p148 = scmp.ne.s32.totalorder %s136, %s137
    %p149 = scmp.eq.s32.totalorder %s22, 1
    %p150 = por %p148, %p149
    %p152 = scmp.ne.s32.totalorder %s137, %s151
    %p153 = scmp.eq.s32.totalorder %s22, 0
    %p154 = por %p152, %p153
    %s156 = sadd.s32 %s155, 1
    %p159 = scmp.eq.s32.totalorder %s16, 1
    %p160 = scmp.ne.s32.totalorder %s155, %s157
    %p161 = scmp.eq.s32.totalorder %s16, 0
    %p162 = por %p160, %p161
    %p163 = scmp.ne.s32.totalorder %s155, %s157
    %p164 = scmp.eq.s32.totalorder %s21, 1
    %p165 = por %p163, %p164
    %p166 = scmp.ne.s32.totalorder %s157, %s158
    %p167 = scmp.eq.s32.totalorder %s21, 0
    %p168 = por %p166, %p167
    %p169 = scmp.ne.s32.totalorder %s157, %s158
    %p170 = scmp.eq.s32.totalorder %s22, 1
    %p171 = por %p169, %p170
    %p173 = scmp.ne.s32.totalorder %s158, %s172
    %p174 = scmp.eq.s32.totalorder %s22, 0
    %p175 = por %p173, %p174
    %s176 = ssub.s32 %s16, %s23
    %p177 = scmp.eq.s32.totalorder %s176, 0
    %s179 = sadd.s32 %s178, 1
    %s180 = scalar_select %p177, %s178, %s179
    %p183 = pneg %p177
    %p184 = scmp.eq.s32.totalorder %s16, 1
    %p185 = por %p183, %p184
    %p186 = scmp.ne.s32.totalorder %s178, %s181
    %p187 = scmp.eq.s32.totalorder %s16, 0
    %p188 = por %p186, %p187
    %p189 = scmp.ne.s32.totalorder %s178, %s181
    %p190 = scmp.eq.s32.totalorder %s21, 1
    %p191 = por %p189, %p190
    %p192 = scmp.ne.s32.totalorder %s181, %s182
    %p193 = scmp.eq.s32.totalorder %s21, 0
    %p194 = por %p192, %p193
    %p195 = scmp.ne.s32.totalorder %s181, %s182
    %p196 = scmp.eq.s32.totalorder %s22, 1
    %p197 = por %p195, %p196
    %p199 = scmp.ne.s32.totalorder %s182, %s198
    %p200 = scmp.eq.s32.totalorder %s22, 0
    %p201 = por %p199, %p200
    %s202 = ssub.s32 %s16, %s23
    %p203 = scmp.eq.s32.totalorder %s202, 0
    %s205 = sadd.s32 %s204, 1
    %s206 = scalar_select %p203, %s204, %s205
    %p209 = pneg %p203
    %p210 = scmp.eq.s32.totalorder %s16, 1
    %p211 = por %p209, %p210
    %p212 = scmp.ne.s32.totalorder %s204, %s207
    %p213 = scmp.eq.s32.totalorder %s16, 0
    %p214 = por %p212, %p213
    %p215 = scmp.ne.s32.totalorder %s204, %s207
    %p216 = scmp.eq.s32.totalorder %s21, 1
    %p217 = por %p215, %p216
    %p218 = scmp.ne.s32.totalorder %s207, %s208
    %p219 = scmp.eq.s32.totalorder %s21, 0
    %p220 = por %p218, %p219
    %p221 = scmp.ne.s32.totalorder %s207, %s208
    %p222 = scmp.eq.s32.totalorder %s22, 1
    %p223 = por %p221, %p222
    %p225 = scmp.ne.s32.totalorder %s208, %s224
    %p226 = scmp.eq.s32.totalorder %s22, 0
    %p227 = por %p225, %p226
    %s228 = ssub.s32 %s16, %s23
    %p229 = scmp.eq.s32.totalorder %s228, 0
    %s231 = sadd.s32 %s230, 1
    %s232 = scalar_select %p229, %s230, %s231
    %p235 = pneg %p229
    %p236 = scmp.eq.s32.totalorder %s16, 1
    %p237 = por %p235, %p236
    %p238 = scmp.ne.s32.totalorder %s230, %s233
    %p239 = scmp.eq.s32.totalorder %s16, 0
    %p240 = por %p238, %p239
    %p241 = scmp.ne.s32.totalorder %s230, %s233
    %p242 = scmp.eq.s32.totalorder %s21, 1
    %p243 = por %p241, %p242
    %p244 = scmp.ne.s32.totalorder %s233, %s234
    %p245 = scmp.eq.s32.totalorder %s21, 0
    %p246 = por %p244, %p245
    %p247 = scmp.ne.s32.totalorder %s233, %s234
    %p248 = scmp.eq.s32.totalorder %s22, 1
    %p249 = por %p247, %p248
    %p251 = scmp.ne.s32.totalorder %s234, %s250
    %p252 = scmp.eq.s32.totalorder %s22, 0
    %p253 = por %p251, %p252
    %p254 = scmp.le.s32.totalorder 1, %s16
    %p255 = scmp.lt.s32.totalorder %s16, 3
    %p256 = pnand %p254, %p255
    %p257 = pneg %p256
    // Predicated region
    $region9: #{conv_transpose_block_2d.1} parent=5 // pred_check
      _
    $region10: #{conv_transpose_block_2d.1} parent=5 // pred_check_branch
      %259 = sbr.rel (%p256) target = $region12
    $region11: #{conv_transpose_block_2d.1} parent=5 // pred_region
      %s260 = ssub.s32 %s16, 1
      // Predicated region
      $region13: #{conv_transpose_block_2d.1} parent=11 // pred_check
        %p261 = pneg %p63
      $region14: #{conv_transpose_block_2d.1} parent=11 // pred_check_branch
        %263 = sbr.rel (%p261) target = $region16
      $region15: #{conv_transpose_block_2d.1} parent=11 // pred_region
        _
      $region16: #{conv_transpose_block_2d.1} parent=11 // pred_fallthru
        _
      // Predicated region
      $region17: #{conv_transpose_block_2d.1} parent=11 // pred_check
        %p264 = pneg %p84
      $region18: #{conv_transpose_block_2d.1} parent=11 // pred_check_branch
        %266 = sbr.rel (%p264) target = $region20
      $region19: #{conv_transpose_block_2d.1} parent=11 // pred_region
        _
      $region20: #{conv_transpose_block_2d.1} parent=11 // pred_fallthru
        _
      // Predicated region
      $region21: #{conv_transpose_block_2d.1} parent=11 // pred_check
        %p267 = pneg %p105
      $region22: #{conv_transpose_block_2d.1} parent=11 // pred_check_branch
        %269 = sbr.rel (%p267) target = $region24
      $region23: #{conv_transpose_block_2d.1} parent=11 // pred_region
        _
      $region24: #{conv_transpose_block_2d.1} parent=11 // pred_fallthru
        _
      // Predicated region
      $region25: #{conv_transpose_block_2d.1} parent=11 // pred_check
        %p270 = pneg %p126
      $region26: #{conv_transpose_block_2d.1} parent=11 // pred_check_branch
        %272 = sbr.rel (%p270) target = $region28
      $region27: #{conv_transpose_block_2d.1} parent=11 // pred_region
        _
      $region28: #{conv_transpose_block_2d.1} parent=11 // pred_fallthru
        _
      // Predicated region
      $region29: #{conv_transpose_block_2d.1} parent=11 // pred_check
        %p273 = pneg %p147
      $region30: #{conv_transpose_block_2d.1} parent=11 // pred_check_branch
        %275 = sbr.rel (%p273) target = $region32
      $region31: #{conv_transpose_block_2d.1} parent=11 // pred_region
        _
      $region32: #{conv_transpose_block_2d.1} parent=11 // pred_fallthru
        _
      // Predicated region
      $region33: #{conv_transpose_block_2d.1} parent=11 // pred_check
        %p276 = pneg %p168
      $region34: #{conv_transpose_block_2d.1} parent=11 // pred_check_branch
        %278 = sbr.rel (%p276) target = $region36
      $region35: #{conv_transpose_block_2d.1} parent=11 // pred_region
        _
      $region36: #{conv_transpose_block_2d.1} parent=11 // pred_fallthru
        _
    $region12: #{conv_transpose_block_2d.1} parent=5 // pred_fallthru
      _
    %p279 = scmp.lt.s32.totalorder %s16, 2
    // Predicated region
    $region37: #{conv_transpose_block_2d.1} parent=5 // pred_check
      %p280 = pneg %p279
    $region38: #{conv_transpose_block_2d.1} parent=5 // pred_check_branch
      %282 = sbr.rel (%p280) target = $region40
    $region39: #{conv_transpose_block_2d.1} parent=5 // pred_region
      // Predicated region
      $region41: #{conv_transpose_block_2d.1} parent=39 // pred_check
        %p283 = pneg %p36
      $region42: #{conv_transpose_block_2d.1} parent=39 // pred_check_branch
        %285 = sbr.rel (%p283) target = $region44
      $region43: #{conv_transpose_block_2d.1} parent=39 // pred_region
        %p286 = scmp.lt.s32.totalorder %s16, 1
        %s287 = scalar_select %p286, %s16, 1
        %s288 = smul.addr %s287, 3
        %s289 = smul.addr %s288, 4
        %s290 = scalar_lea.vmem %s0, %s289
      $region44: #{conv_transpose_block_2d.1} parent=39 // pred_fallthru
        _
    $region40: #{conv_transpose_block_2d.1} parent=5 // pred_fallthru
      _
    %p291 = scmp.le.s32.totalorder 1, %s16
    %p292 = scmp.lt.s32.totalorder %s16, 3
    %p293 = pnand %p291, %p292
    %p294 = pneg %p293
    // Predicated region
    $region45: #{conv_transpose_block_2d.1} parent=5 // pred_check
      _
    $region46: #{conv_transpose_block_2d.1} parent=5 // pred_check_branch
      %296 = sbr.rel (%p293) target = $region48
    $region47: #{conv_transpose_block_2d.1} parent=5 // pred_region
      %s297 = ssub.s32 %s16, 1
      %p298 = scmp.lt.s32.totalorder %s21, 1
      %s299 = scalar_select %p298, %s21, 1
      %s300 = smul.addr %s299, 3
      %s301 = smul.addr %s300, 4
      %s302 = scalar_lea.vmem %s0, %s301
      %p303 = pneg %p42
      %p304 = pneg %p39
      %p305 = pneg %p63
      %p306 = pneg %p60
      %p307 = pneg %p84
      %p308 = pneg %p81
      %p309 = pneg %p105
      %p310 = pneg %p102
      %p311 = pneg %p126
      %p312 = pneg %p123
      %p313 = pneg %p147
      %p314 = pneg %p144
      %p315 = pneg %p168
      %p316 = pneg %p165
      %p317 = pneg %p194
      %p318 = pneg %p191
      %p319 = scmp.lt.s32.totalorder %s21, 1
      %s320 = scalar_select %p319, %s21, 1
      %s321 = smul.addr %s320, 12
      %s322 = smul.addr %s321, 4
      %s323 = scalar_lea.vmem %s7, %s322
      %p324 = pneg %p220
      %p325 = pneg %p217
      %p326 = scmp.lt.s32.totalorder %s21, 1
      %s327 = scalar_select %p326, %s21, 1
      %s328 = smul.addr %s327, 8
      %s329 = scalar_lea.vmem %s8, %s328
      %p330 = pneg %p246
      %p331 = pneg %p243
      %p332 = scmp.lt.s32.totalorder %s21, 1
      %s333 = scalar_select %p332, %s21, 1
      %s334 = smul.addr %s333, 8
      %s335 = scalar_lea.vmem %s9, %s334
      %p336 = scmp.lt.s32.totalorder %s21, 1
      %s337 = scalar_select %p336, %s21, 1
      %s338 = smul.addr %s337, 3
      %s339 = smul.addr %s338, 4
      %s340 = scalar_lea.vmem %s0, %s339
      %p341 = scmp.lt.s32.totalorder %s21, 1
      %s342 = scalar_select %p341, %s21, 1
      %s343 = smul.addr %s342, 12
      %s344 = smul.addr %s343, 4
      %s345 = scalar_lea.vmem %s7, %s344
      %p346 = scmp.lt.s32.totalorder %s21, 1
      %s347 = scalar_select %p346, %s21, 1
      %s348 = smul.addr %s347, 8
      %s349 = scalar_lea.vmem %s8, %s348
      %p350 = scmp.lt.s32.totalorder %s21, 1
      %s351 = scalar_select %p350, %s21, 1
      %s352 = smul.addr %s351, 8
      %s353 = scalar_lea.vmem %s9, %s352
      %vm354 = vcmask 158720
      %355 = vst.msk [vmem:[#allocation2] sm:$0xf] %vm354, 0.0
      %356 = vst.msk [vmem:[#allocation2 + $0xc] sm:$0xf] %vm354, 0.0
      %357 = vst.msk [vmem:[#allocation2 + $0x18] sm:$0xf] %vm354, 0.0
      %358 = vst.msk [vmem:[#allocation2 + $0x24] sm:$0xf] %vm354, 0.0
      %vm359 = vcmask 872104
      %360 = vst.msk [vmem:[#allocation2 + $0x8] sm:$0xf] %vm359, 0.0
      %361 = vst.msk [vmem:[#allocation2 + $0x14] sm:$0xf] %vm359, 0.0
      %362 = vst.msk [vmem:[#allocation2 + $0x20] sm:$0xf] %vm359, 0.0
      %363 = vst.msk [vmem:[#allocation2 + $0x2c] sm:$0xf] %vm359, 0.0
      %v364 = vld [vmem:[%s340] sm:$0xff]
      %v365 = vld [vmem:[%s340 + $0x8] sm:$0xf]
      %v368 = vcombine.high %v364, %v364
      %v370 = vcombine.low %v364, %v364
      %v371 = vcombine.low %v365, %v365
      %372 = vrot.lane.b32.xlu0 %v370, 127
      %v373 = vpop.permute.xlu0 %372
      %374 = vrot.lane.b32.xlu0 %v364, 127
      %v375 = vpop.permute.xlu0 %374
      %376 = vrot.lane.b32.xlu0 %v371, 127
      %v377 = vpop.permute.xlu0 %376
      %vm378 = vcmask 1039360
      %v379 = vsel %vm378, %v373, %v375
      %v380 = vsel %vm378, %v375, %v377
      %384 = vrot.lane.b32.xlu0 %v364, 109
      %v385 = vpop.permute.xlu0 %384
      %386 = vrot.lane.b32.xlu0 %v368, 109
      %v387 = vpop.permute.xlu0 %386
      %388 = vrot.lane.b32.xlu0 %v365, 109
      %v389 = vpop.permute.xlu0 %388
      %vm390 = vcmask 891904
      %v391 = vsel %vm390, %v385, %v387
      %v392 = vsel %vm390, %v387, %v389
      %396 = vrot.lane.b32.xlu0 %v370, 108
      %v397 = vpop.permute.xlu0 %396
      %398 = vrot.lane.b32.xlu0 %v364, 108
      %v399 = vpop.permute.xlu0 %398
      %400 = vrot.lane.b32.xlu0 %v371, 108
      %v401 = vpop.permute.xlu0 %400
      %vm402 = vcmask 883712
      %v403 = vsel %vm402, %v397, %v399
      %v404 = vsel %vm402, %v399, %v401
      %vm408 = vcmask 1043456
      %v409 = vsel %vm408, %v364, %v379
      %v410 = vsel %vm408, %v368, %v380
      %v411 = vsel %vm408, %v365, %v377
      %v412 = vsel %vm408, %v391, %v403
      %v413 = vsel %vm408, %v392, %v404
      %v414 = vsel %vm408, %v389, %v401
      %v415 = vld [vmem:[%s1] sm:$0xf]
      %v416 = vld [vmem:[%s2] sm:$0xf]
      %418 = vset.pattern.permute.xlu0 0
      %419 = vperm.xlu0 %418, %v416
      %v420 = vpop.permute.xlu0 %419
      %vm422 = vcmask 130048
      %v424 = vsel %vm422, %v415, 0
      %426 = vmatprep.subr.mxu0 %v410
      %427 = vmatpush1.msra.mxu0 %v409
      %428 = vmatprep.subr.mxu0 %v413
      %429 = vmatpush1.msra.mxu0 %v412
      %430 = vmatprep.subr.mxu0 0.0
      %431 = vmatpush1.msra.mxu0 0.0
      %432 = vmatprep.subr.mxu0 0.0
      %433 = vmatpush1.msra.mxu0 0.0
      %434 = vmatprep.subr.mxu0 0.0
      %435 = vmatpush1.msra.mxu0 0.0
      %436 = vmatprep.subr.mxu0 0.0
      %437 = vmatpush1.msra.mxu0 0.0
      %438 = vmatprep.subr.mxu0 0.0
      %439 = vmatpush1.msra.mxu0 0.0
      %440 = vmatprep.subr.mxu0 0.0
      %441 = vmatpush1.msra.mxu0 0.0
      %442 = vmatprep.subr.mxu0 0.0
      %443 = vmatpush1.msra.mxu0 0.0
      %444 = vmatprep.subr.mxu0 0.0
      %445 = vmatpush1.msra.mxu0 0.0
      %446 = vmatprep.subr.mxu0 0.0
      %447 = vmatpush1.msra.mxu0 0.0
      %448 = vmatprep.subr.mxu0 0.0
      %449 = vmatpush1.msra.mxu0 0.0
      %450 = vmatprep.subr.mxu0 0.0
      %451 = vmatpush1.msra.mxu0 0.0
      %452 = vmatprep.subr.mxu0 0.0
      %453 = vmatpush1.msra.mxu0 0.0
      %454 = vmatprep.subr.mxu0 0.0
      %455 = vmatpush1.msra.mxu0 0.0
      %456 = vmatprep.subr.mxu0 0.0
      %457 = vmatpush1.msra.mxu0 0.0
      %458 = vmatprep.subr.mxu0 0.0
      %459 = vmatpush1.msra.mxu0 0.0
      %460 = vmatprep.subr.mxu0 0.0
      %461 = vmatpush1.msra.mxu0 0.0
      %462 = vmatprep.subr.mxu0 0.0
      %463 = vmatpush1.msra.mxu0 0.0
      %464 = vmatprep.subr.mxu0 0.0
      %465 = vmatpush1.msra.mxu0 0.0
      %466 = vmatprep.subr.mxu0 0.0
      %467 = vmatpush1.msra.mxu0 0.0
      %468 = vmatprep.subr.mxu0 0.0
      %469 = vmatpush1.msra.mxu0 0.0
      %470 = vmatprep.subr.mxu0 0.0
      %471 = vmatpush1.msra.mxu0 0.0
      %472 = vmatprep.subr.mxu0 0.0
      %473 = vmatpush1.msra.mxu0 0.0
      %474 = vmatprep.subr.mxu0 0.0
      %475 = vmatpush1.msra.mxu0 0.0
      %476 = vmatprep.subr.mxu0 0.0
      %477 = vmatpush1.msra.mxu0 0.0
      %478 = vmatprep.subr.mxu0 0.0
      %479 = vmatpush1.msra.mxu0 0.0
      %480 = vmatprep.subr.mxu0 0.0
      %481 = vmatpush1.msra.mxu0 0.0
      %482 = vmatprep.subr.mxu0 0.0
      %483 = vmatpush1.msra.mxu0 0.0
      %484 = vmatprep.subr.mxu0 0.0
      %485 = vmatpush1.msra.mxu0 0.0
      %486 = vmatprep.subr.mxu0 0.0
      %487 = vmatpush1.msra.mxu0 0.0
      %488 = vmatprep.subr.mxu0 0.0
      %489 = vmatpush1.msra.mxu0 0.0
      %490 = vmatprep.mubr.f32.mxu0 0.0
      %491 = vmatmul.mubr.f32.gmra.mrb[0].mxu0 %v424
      %v492 = vpop.f32.mrb[0].mxu0
      %v493 = vadd.f32 %v420, %v492
      %v494 = vpop.f32.mrb[0].mxu0
      %v495 = vadd.f32 %v420, %v494
      %496 = vdwg.mxu0
      %497 = vmatprep.subr.mxu0 0.0
      %498 = vmatpush1.msra.mxu0 %v411
      %499 = vmatprep.subr.mxu0 0.0
      %500 = vmatpush1.msra.mxu0 %v414
      %501 = vmatprep.subr.mxu0 0.0
      %502 = vmatpush1.msra.mxu0 0.0
      %503 = vmatprep.subr.mxu0 0.0
      %504 = vmatpush1.msra.mxu0 0.0
      %505 = vmatprep.subr.mxu0 0.0
      %506 = vmatpush1.msra.mxu0 0.0
      %507 = vmatprep.subr.mxu0 0.0
      %508 = vmatpush1.msra.mxu0 0.0
      %509 = vmatprep.subr.mxu0 0.0
      %510 = vmatpush1.msra.mxu0 0.0
      %511 = vmatprep.subr.mxu0 0.0
      %512 = vmatpush1.msra.mxu0 0.0
      %513 = vmatprep.subr.mxu0 0.0
      %514 = vmatpush1.msra.mxu0 0.0
      %515 = vmatprep.subr.mxu0 0.0
      %516 = vmatpush1.msra.mxu0 0.0
      %517 = vmatprep.subr.mxu0 0.0
      %518 = vmatpush1.msra.mxu0 0.0
      %519 = vmatprep.subr.mxu0 0.0
      %520 = vmatpush1.msra.mxu0 0.0
      %521 = vmatprep.subr.mxu0 0.0
      %522 = vmatpush1.msra.mxu0 0.0
      %523 = vmatprep.subr.mxu0 0.0
      %524 = vmatpush1.msra.mxu0 0.0
      %525 = vmatprep.subr.mxu0 0.0
      %526 = vmatpush1.msra.mxu0 0.0
      %527 = vmatprep.subr.mxu0 0.0
      %528 = vmatpush1.msra.mxu0 0.0
      %529 = vmatprep.subr.mxu0 0.0
      %530 = vmatpush1.msra.mxu0 0.0
      %531 = vmatprep.subr.mxu0 0.0
      %532 = vmatpush1.msra.mxu0 0.0
      %533 = vmatprep.subr.mxu0 0.0
      %534 = vmatpush1.msra.mxu0 0.0
      %535 = vmatprep.subr.mxu0 0.0
      %536 = vmatpush1.msra.mxu0 0.0
      %537 = vmatprep.subr.mxu0 0.0
      %538 = vmatpush1.msra.mxu0 0.0
      %539 = vmatprep.subr.mxu0 0.0
      %540 = vmatpush1.msra.mxu0 0.0
      %541 = vmatprep.subr.mxu0 0.0
      %542 = vmatpush1.msra.mxu0 0.0
      %543 = vmatprep.subr.mxu0 0.0
      %544 = vmatpush1.msra.mxu0 0.0
      %545 = vmatprep.subr.mxu0 0.0
      %546 = vmatpush1.msra.mxu0 0.0
      %547 = vmatprep.subr.mxu0 0.0
      %548 = vmatpush1.msra.mxu0 0.0
      %549 = vmatprep.subr.mxu0 0.0
      %550 = vmatpush1.msra.mxu0 0.0
      %551 = vmatprep.subr.mxu0 0.0
      %552 = vmatpush1.msra.mxu0 0.0
      %553 = vmatprep.subr.mxu0 0.0
      %554 = vmatpush1.msra.mxu0 0.0
      %555 = vmatprep.subr.mxu0 0.0
      %556 = vmatpush1.msra.mxu0 0.0
      %557 = vmatprep.subr.mxu0 0.0
      %558 = vmatpush1.msra.mxu0 0.0
      %559 = vmatprep.subr.mxu0 0.0
      %560 = vmatpush1.msra.mxu0 0.0
      %561 = vmatprep.mubr.f32.mxu0 0.0
      %562 = vmatmul.mubr.f32.gmra.mrb[0].mxu0 %v424
      %v563 = vpop.f32.mrb[0].mxu0
      %v564 = vadd.f32 %v420, %v563
      %v565 = vpop.f32.mrb[0].mxu0
      %566 = vdwg.mxu0
      %v567 = vld [vmem:[%s5] sm:$0x7]
      %v569 = vlaneseq
      %v570 = vshrl.u32 %v569, 7
      %v571 = vsub.s32 0, %v570
      %v572 = vrot.slane %v567, %v571
      %v573 = vlaneseq
      %v574 = vshrl.u32 %v573, 7
      %v575 = vsub.s32 1, %v574
      %v576 = vrot.slane %v567, %v575
      %v577 = vlaneseq
      %v578 = vshrl.u32 %v577, 7
      %v579 = vsub.s32 2, %v578
      %v580 = vrot.slane %v567, %v579
      %v584 = vmul.f32 %v493, %v572
      %v585 = vmul.f32 %v495, %v576
      %v586 = vmul.f32 %v564, %v580
      %v590 = vcombine.low %v584, %v585
      %591 = vrot.lane.b32.xlu0 %v590, 20
      %v592 = vpop.permute.xlu0 %591
      %593 = vrot.lane.b32.xlu0 %v586, 20
      %v594 = vpop.permute.xlu0 %593
      %v595 = vrot.slane %v592, 4
      %vm596 = vcmask 162816
      %v597 = vsel %vm596, %v595, %v592
      %v598 = vsel %vm596, %v595, %v594
      %vm601 = vcmask 1043616
      %vm602 = vcmask 1047556
      %vm603 = vmor %vm602, %vm601
      %604 = vst.msk [vmem:[#allocation2] sm:$0xff] %vm603, %v597
      %vm605 = vcmask 691200
      %606 = vst.msk [vmem:[#allocation2 + $0x8] sm:$0xf] %vm605, %v598
      %s607 = scalar_lea.vmem %s1, 4
      %v608 = vld [vmem:[%s607] sm:$0xf]
      %v609 = vld [vmem:[%s2] sm:$0xf]
      %611 = vset.pattern.permute.xlu0 0
      %612 = vperm.xlu0 %611, %v609
      %v613 = vpop.permute.xlu0 %612
      %v616 = vsel %vm422, %v608, 0
      %618 = vmatprep.subr.mxu0 %v410
      %619 = vmatpush1.msra.mxu0 %v409
      %620 = vmatprep.subr.mxu0 %v413
      %621 = vmatpush1.msra.mxu0 %v412
      %622 = vmatprep.subr.mxu0 0.0
      %623 = vmatpush1.msra.mxu0 0.0
      %624 = vmatprep.subr.mxu0 0.0
      %625 = vmatpush1.msra.mxu0 0.0
      %626 = vmatprep.subr.mxu0 0.0
      %627 = vmatpush1.msra.mxu0 0.0
      %628 = vmatprep.subr.mxu0 0.0
      %629 = vmatpush1.msra.mxu0 0.0
      %630 = vmatprep.subr.mxu0 0.0
      %631 = vmatpush1.msra.mxu0 0.0
      %632 = vmatprep.subr.mxu0 0.0
      %633 = vmatpush1.msra.mxu0 0.0
      %634 = vmatprep.subr.mxu0 0.0
      %635 = vmatpush1.msra.mxu0 0.0
      %636 = vmatprep.subr.mxu0 0.0
      %637 = vmatpush1.msra.mxu0 0.0
      %638 = vmatprep.subr.mxu0 0.0
      %639 = vmatpush1.msra.mxu0 0.0
      %640 = vmatprep.subr.mxu0 0.0
      %641 = vmatpush1.msra.mxu0 0.0
      %642 = vmatprep.subr.mxu0 0.0
      %643 = vmatpush1.msra.mxu0 0.0
      %644 = vmatprep.subr.mxu0 0.0
      %645 = vmatpush1.msra.mxu0 0.0
      %646 = vmatprep.subr.mxu0 0.0
      %647 = vmatpush1.msra.mxu0 0.0
      %648 = vmatprep.subr.mxu0 0.0
      %649 = vmatpush1.msra.mxu0 0.0
      %650 = vmatprep.subr.mxu0 0.0
      %651 = vmatpush1.msra.mxu0 0.0
      %652 = vmatprep.subr.mxu0 0.0
      %653 = vmatpush1.msra.mxu0 0.0
      %654 = vmatprep.subr.mxu0 0.0
      %655 = vmatpush1.msra.mxu0 0.0
      %656 = vmatprep.subr.mxu0 0.0
      %657 = vmatpush1.msra.mxu0 0.0
      %658 = vmatprep.subr.mxu0 0.0
      %659 = vmatpush1.msra.mxu0 0.0
      %660 = vmatprep.subr.mxu0 0.0
      %661 = vmatpush1.msra.mxu0 0.0
      %662 = vmatprep.subr.mxu0 0.0
      %663 = vmatpush1.msra.mxu0 0.0
      %664 = vmatprep.subr.mxu0 0.0
      %665 = vmatpush1.msra.mxu0 0.0
      %666 = vmatprep.subr.mxu0 0.0
      %667 = vmatpush1.msra.mxu0 0.0
      %668 = vmatprep.subr.mxu0 0.0
      %669 = vmatpush1.msra.mxu0 0.0
      %670 = vmatprep.subr.mxu0 0.0
      %671 = vmatpush1.msra.mxu0 0.0
      %672 = vmatprep.subr.mxu0 0.0
      %673 = vmatpush1.msra.mxu0 0.0
      %674 = vmatprep.subr.mxu0 0.0
      %675 = vmatpush1.msra.mxu0 0.0
      %676 = vmatprep.subr.mxu0 0.0
      %677 = vmatpush1.msra.mxu0 0.0
      %678 = vmatprep.subr.mxu0 0.0
      %679 = vmatpush1.msra.mxu0 0.0
      %680 = vmatprep.subr.mxu0 0.0
      %681 = vmatpush1.msra.mxu0 0.0
      %682 = vmatprep.mubr.f32.mxu0 0.0
      %683 = vmatmul.mubr.f32.gmra.mrb[0].mxu0 %v616
      %v684 = vpop.f32.mrb[0].mxu0
      %v685 = vadd.f32 %v613, %v684
      %v686 = vpop.f32.mrb[0].mxu0
      %v687 = vadd.f32 %v613, %v686
      %688 = vdwg.mxu0
      %689 = vmatprep.subr.mxu0 0.0
      %690 = vmatpush1.msra.mxu0 %v411
      %691 = vmatprep.subr.mxu0 0.0
      %692 = vmatpush1.msra.mxu0 %v414
      %693 = vmatprep.subr.mxu0 0.0
      %694 = vmatpush1.msra.mxu0 0.0
      %695 = vmatprep.subr.mxu0 0.0
      %696 = vmatpush1.msra.mxu0 0.0
      %697 = vmatprep.subr.mxu0 0.0
      %698 = vmatpush1.msra.mxu0 0.0
      %699 = vmatprep.subr.mxu0 0.0
      %700 = vmatpush1.msra.mxu0 0.0
      %701 = vmatprep.subr.mxu0 0.0
      %702 = vmatpush1.msra.mxu0 0.0
      %703 = vmatprep.subr.mxu0 0.0
      %704 = vmatpush1.msra.mxu0 0.0
      %705 = vmatprep.subr.mxu0 0.0
      %706 = vmatpush1.msra.mxu0 0.0
      %707 = vmatprep.subr.mxu0 0.0
      %708 = vmatpush1.msra.mxu0 0.0
      %709 = vmatprep.subr.mxu0 0.0
      %710 = vmatpush1.msra.mxu0 0.0
      %711 = vmatprep.subr.mxu0 0.0
      %712 = vmatpush1.msra.mxu0 0.0
      %713 = vmatprep.subr.mxu0 0.0
      %714 = vmatpush1.msra.mxu0 0.0
      %715 = vmatprep.subr.mxu0 0.0
      %716 = vmatpush1.msra.mxu0 0.0
      %717 = vmatprep.subr.mxu0 0.0
      %718 = vmatpush1.msra.mxu0 0.0
      %719 = vmatprep.subr.mxu0 0.0
      %720 = vmatpush1.msra.mxu0 0.0
      %721 = vmatprep.subr.mxu0 0.0
      %722 = vmatpush1.msra.mxu0 0.0
      %723 = vmatprep.subr.mxu0 0.0
      %724 = vmatpush1.msra.mxu0 0.0
      %725 = vmatprep.subr.mxu0 0.0
      %726 = vmatpush1.msra.mxu0 0.0
      %727 = vmatprep.subr.mxu0 0.0
      %728 = vmatpush1.msra.mxu0 0.0
      %729 = vmatprep.subr.mxu0 0.0
      %730 = vmatpush1.msra.mxu0 0.0
      %731 = vmatprep.subr.mxu0 0.0
      %732 = vmatpush1.msra.mxu0 0.0
      %733 = vmatprep.subr.mxu0 0.0
      %734 = vmatpush1.msra.mxu0 0.0
      %735 = vmatprep.subr.mxu0 0.0
      %736 = vmatpush1.msra.mxu0 0.0
      %737 = vmatprep.subr.mxu0 0.0
      %738 = vmatpush1.msra.mxu0 0.0
      %739 = vmatprep.subr.mxu0 0.0
      %740 = vmatpush1.msra.mxu0 0.0
      %741 = vmatprep.subr.mxu0 0.0
      %742 = vmatpush1.msra.mxu0 0.0
      %743 = vmatprep.subr.mxu0 0.0
      %744 = vmatpush1.msra.mxu0 0.0
      %745 = vmatprep.subr.mxu0 0.0
      %746 = vmatpush1.msra.mxu0 0.0
      %747 = vmatprep.subr.mxu0 0.0
      %748 = vmatpush1.msra.mxu0 0.0
      %749 = vmatprep.subr.mxu0 0.0
      %750 = vmatpush1.msra.mxu0 0.0
      %751 = vmatprep.subr.mxu0 0.0
      %752 = vmatpush1.msra.mxu0 0.0
      %753 = vmatprep.mubr.f32.mxu0 0.0
      %754 = vmatmul.mubr.f32.gmra.mrb[0].mxu0 %v616
      %v755 = vpop.f32.mrb[0].mxu0
      %v756 = vadd.f32 %v613, %v755
      %v757 = vpop.f32.mrb[0].mxu0
      %758 = vdwg.mxu0
      %v759 = vld [vmem:[%s5] sm:$0x7]
      %v761 = vlaneseq
      %v762 = vshrl.u32 %v761, 7
      %v763 = vsub.s32 0, %v762
      %v764 = vrot.slane %v759, %v763
      %v765 = vlaneseq
      %v766 = vshrl.u32 %v765, 7
      %v767 = vsub.s32 1, %v766
      %v768 = vrot.slane %v759, %v767
      %v769 = vlaneseq
      %v770 = vshrl.u32 %v769, 7
      %v771 = vsub.s32 2, %v770
      %v772 = vrot.slane %v759, %v771
      %v776 = vmul.f32 %v685, %v764
      %v777 = vmul.f32 %v687, %v768
      %v778 = vmul.f32 %v756, %v772
      %v782 = vcombine.low %v776, %v777
      %783 = vrot.lane.b32.xlu0 %v782, 20
      %v784 = vpop.permute.xlu0 %783
      %785 = vrot.lane.b32.xlu0 %v778, 20
      %v786 = vpop.permute.xlu0 %785
      %v787 = vrot.slane %v784, 4
      %v788 = vsel %vm596, %v787, %v784
      %v789 = vsel %vm596, %v787, %v786
      %s792 = scalar_lea.vmem [#allocation2], 12
      %793 = vst.msk [vmem:[%s792] sm:$0xff] %vm603, %v788
      %794 = vst.msk [vmem:[%s792 + $0x8] sm:$0xf] %vm605, %v789
      %s795 = scalar_lea.vmem %s1, 8
      %v796 = vld [vmem:[%s795] sm:$0xf]
      %v797 = vld [vmem:[%s2] sm:$0xf]
      %799 = vset.pattern.permute.xlu0 0
      %800 = vperm.xlu0 %799, %v797
      %v801 = vpop.permute.xlu0 %800
      %v804 = vsel %vm422, %v796, 0
      %806 = vmatprep.subr.mxu0 %v410
      %807 = vmatpush1.msra.mxu0 %v409
      %808 = vmatprep.subr.mxu0 %v413
      %809 = vmatpush1.msra.mxu0 %v412
      %810 = vmatprep.subr.mxu0 0.0
      %811 = vmatpush1.msra.mxu0 0.0
      %812 = vmatprep.subr.mxu0 0.0
      %813 = vmatpush1.msra.mxu0 0.0
      %814 = vmatprep.subr.mxu0 0.0
      %815 = vmatpush1.msra.mxu0 0.0
      %816 = vmatprep.subr.mxu0 0.0
      %817 = vmatpush1.msra.mxu0 0.0
      %818 = vmatprep.subr.mxu0 0.0
      %819 = vmatpush1.msra.mxu0 0.0
      %820 = vmatprep.subr.mxu0 0.0
      %821 = vmatpush1.msra.mxu0 0.0
      %822 = vmatprep.subr.mxu0 0.0
      %823 = vmatpush1.msra.mxu0 0.0
      %824 = vmatprep.subr.mxu0 0.0
      %825 = vmatpush1.msra.mxu0 0.0
      %826 = vmatprep.subr.mxu0 0.0
      %827 = vmatpush1.msra.mxu0 0.0
      %828 = vmatprep.subr.mxu0 0.0
      %829 = vmatpush1.msra.mxu0 0.0
      %830 = vmatprep.subr.mxu0 0.0
      %831 = vmatpush1.msra.mxu0 0.0
      %832 = vmatprep.subr.mxu0 0.0
      %833 = vmatpush1.msra.mxu0 0.0
      %834 = vmatprep.subr.mxu0 0.0
      %835 = vmatpush1.msra.mxu0 0.0
      %836 = vmatprep.subr.mxu0 0.0
      %837 = vmatpush1.msra.mxu0 0.0
      %838 = vmatprep.subr.mxu0 0.0
      %839 = vmatpush1.msra.mxu0 0.0
      %840 = vmatprep.subr.mxu0 0.0
      %841 = vmatpush1.msra.mxu0 0.0
      %842 = vmatprep.subr.mxu0 0.0
      %843 = vmatpush1.msra.mxu0 0.0
      %844 = vmatprep.subr.mxu0 0.0
      %845 = vmatpush1.msra.mxu0 0.0
      %846 = vmatprep.subr.mxu0 0.0
      %847 = vmatpush1.msra.mxu0 0.0
      %848 = vmatprep.subr.mxu0 0.0
      %849 = vmatpush1.msra.mxu0 0.0
      %850 = vmatprep.subr.mxu0 0.0
      %851 = vmatpush1.msra.mxu0 0.0
      %852 = vmatprep.subr.mxu0 0.0
      %853 = vmatpush1.msra.mxu0 0.0
      %854 = vmatprep.subr.mxu0 0.0
      %855 = vmatpush1.msra.mxu0 0.0
      %856 = vmatprep.subr.mxu0 0.0
      %857 = vmatpush1.msra.mxu0 0.0
      %858 = vmatprep.subr.mxu0 0.0
      %859 = vmatpush1.msra.mxu0 0.0
      %860 = vmatprep.subr.mxu0 0.0
      %861 = vmatpush1.msra.mxu0 0.0
      %862 = vmatprep.subr.mxu0 0.0
      %863 = vmatpush1.msra.mxu0 0.0
      %864 = vmatprep.subr.mxu0 0.0
      %865 = vmatpush1.msra.mxu0 0.0
      %866 = vmatprep.subr.mxu0 0.0
      %867 = vmatpush1.msra.mxu0 0.0
      %868 = vmatprep.subr.mxu0 0.0
      %869 = vmatpush1.msra.mxu0 0.0
      %870 = vmatprep.mubr.f32.mxu0 0.0
      %871 = vmatmul.mubr.f32.gmra.mrb[0].mxu0 %v804
      %v872 = vpop.f32.mrb[0].mxu0
      %v873 = vadd.f32 %v801, %v872
      %v874 = vpop.f32.mrb[0].mxu0
      %v875 = vadd.f32 %v801, %v874
      %876 = vdwg.mxu0
      %877 = vmatprep.subr.mxu0 0.0
      %878 = vmatpush1.msra.mxu0 %v411
      %879 = vmatprep.subr.mxu0 0.0
      %880 = vmatpush1.msra.mxu0 %v414
      %881 = vmatprep.subr.mxu0 0.0
      %882 = vmatpush1.msra.mxu0 0.0
      %883 = vmatprep.subr.mxu0 0.0
      %884 = vmatpush1.msra.mxu0 0.0
      %885 = vmatprep.subr.mxu0 0.0
      %886 = vmatpush1.msra.mxu0 0.0
      %887 = vmatprep.subr.mxu0 0.0
      %888 = vmatpush1.msra.mxu0 0.0
      %889 = vmatprep.subr.mxu0 0.0
      %890 = vmatpush1.msra.mxu0 0.0
      %891 = vmatprep.subr.mxu0 0.0
      %892 = vmatpush1.msra.mxu0 0.0
      %893 = vmatprep.subr.mxu0 0.0
      %894 = vmatpush1.msra.mxu0 0.0
      %895 = vmatprep.subr.mxu0 0.0
      %896 = vmatpush1.msra.mxu0 0.0
      %897 = vmatprep.subr.mxu0 0.0
      %898 = vmatpush1.msra.mxu0 0.0
      %899 = vmatprep.subr.mxu0 0.0
      %900 = vmatpush1.msra.mxu0 0.0
      %901 = vmatprep.subr.mxu0 0.0
      %902 = vmatpush1.msra.mxu0 0.0
      %903 = vmatprep.subr.mxu0 0.0
      %904 = vmatpush1.msra.mxu0 0.0
      %905 = vmatprep.subr.mxu0 0.0
      %906 = vmatpush1.msra.mxu0 0.0
      %907 = vmatprep.subr.mxu0 0.0
      %908 = vmatpush1.msra.mxu0 0.0
      %909 = vmatprep.subr.mxu0 0.0
      %910 = vmatpush1.msra.mxu0 0.0
      %911 = vmatprep.subr.mxu0 0.0
      %912 = vmatpush1.msra.mxu0 0.0
      %913 = vmatprep.subr.mxu0 0.0
      %914 = vmatpush1.msra.mxu0 0.0
      %915 = vmatprep.subr.mxu0 0.0
      %916 = vmatpush1.msra.mxu0 0.0
      %917 = vmatprep.subr.mxu0 0.0
      %918 = vmatpush1.msra.mxu0 0.0
      %919 = vmatprep.subr.mxu0 0.0
      %920 = vmatpush1.msra.mxu0 0.0
      %921 = vmatprep.subr.mxu0 0.0
      %922 = vmatpush1.msra.mxu0 0.0
      %923 = vmatprep.subr.mxu0 0.0
      %924 = vmatpush1.msra.mxu0 0.0
      %925 = vmatprep.subr.mxu0 0.0
      %926 = vmatpush1.msra.mxu0 0.0
      %927 = vmatprep.subr.mxu0 0.0
      %928 = vmatpush1.msra.mxu0 0.0
      %929 = vmatprep.subr.mxu0 0.0
      %930 = vmatpush1.msra.mxu0 0.0
      %931 = vmatprep.subr.mxu0 0.0
      %932 = vmatpush1.msra.mxu0 0.0
      %933 = vmatprep.subr.mxu0 0.0
      %934 = vmatpush1.msra.mxu0 0.0
      %935 = vmatprep.subr.mxu0 0.0
      %936 = vmatpush1.msra.mxu0 0.0
      %937 = vmatprep.subr.mxu0 0.0
      %938 = vmatpush1.msra.mxu0 0.0
      %939 = vmatprep.subr.mxu0 0.0
      %940 = vmatpush1.msra.mxu0 0.0
      %941 = vmatprep.mubr.f32.mxu0 0.0
      %942 = vmatmul.mubr.f32.gmra.mrb[0].mxu0 %v804
      %v943 = vpop.f32.mrb[0].mxu0
      %v944 = vadd.f32 %v801, %v943
      %v945 = vpop.f32.mrb[0].mxu0
      %946 = vdwg.mxu0
      %v947 = vld [vmem:[%s5] sm:$0x7]
      %v949 = vlaneseq
      %v950 = vshrl.u32 %v949, 7
      %v951 = vsub.s32 0, %v950
      %v952 = vrot.slane %v947, %v951
      %v953 = vlaneseq
      %v954 = vshrl.u32 %v953, 7
      %v955 = vsub.s32 1, %v954
      %v956 = vrot.slane %v947, %v955
      %v957 = vlaneseq
      %v958 = vshrl.u32 %v957, 7
      %v959 = vsub.s32 2, %v958
      %v960 = vrot.slane %v947, %v959
      %v964 = vmul.f32 %v873, %v952
      %v965 = vmul.f32 %v875, %v956
      %v966 = vmul.f32 %v944, %v960
      %v970 = vcombine.low %v964, %v965
      %971 = vrot.lane.b32.xlu0 %v970, 20
      %v972 = vpop.permute.xlu0 %971
      %973 = vrot.lane.b32.xlu0 %v966, 20
      %v974 = vpop.permute.xlu0 %973
      %v975 = vrot.slane %v972, 4
      %v976 = vsel %vm596, %v975, %v972
      %v977 = vsel %vm596, %v975, %v974
      %s980 = scalar_lea.vmem [#allocation2], 24
      %981 = vst.msk [vmem:[%s980] sm:$0xff] %vm603, %v976
      %982 = vst.msk [vmem:[%s980 + $0x8] sm:$0xf] %vm605, %v977
      %s983 = scalar_lea.vmem %s1, 12
      %v984 = vld [vmem:[%s983] sm:$0xf]
      %v985 = vld [vmem:[%s2] sm:$0xf]
      %987 = vset.pattern.permute.xlu0 0
      %988 = vperm.xlu0 %987, %v985
      %v989 = vpop.permute.xlu0 %988
      %v992 = vsel %vm422, %v984, 0
      %994 = vmatprep.subr.mxu0 %v410
      %995 = vmatpush1.msra.mxu0 %v409
      %996 = vmatprep.subr.mxu0 %v413
      %997 = vmatpush1.msra.mxu0 %v412
      %998 = vmatprep.subr.mxu0 0.0
      %999 = vmatpush1.msra.mxu0 0.0
      %1000 = vmatprep.subr.mxu0 0.0
      %1001 = vmatpush1.msra.mxu0 0.0
      %1002 = vmatprep.subr.mxu0 0.0
      %1003 = vmatpush1.msra.mxu0 0.0
      %1004 = vmatprep.subr.mxu0 0.0
      %1005 = vmatpush1.msra.mxu0 0.0
      %1006 = vmatprep.subr.mxu0 0.0
      %1007 = vmatpush1.msra.mxu0 0.0
      %1008 = vmatprep.subr.mxu0 0.0
      %1009 = vmatpush1.msra.mxu0 0.0
      %1010 = vmatprep.subr.mxu0 0.0
      %1011 = vmatpush1.msra.mxu0 0.0
      %1012 = vmatprep.subr.mxu0 0.0
      %1013 = vmatpush1.msra.mxu0 0.0
      %1014 = vmatprep.subr.mxu0 0.0
      %1015 = vmatpush1.msra.mxu0 0.0
      %1016 = vmatprep.subr.mxu0 0.0
      %1017 = vmatpush1.msra.mxu0 0.0
      %1018 = vmatprep.subr.mxu0 0.0
      %1019 = vmatpush1.msra.mxu0 0.0
      %1020 = vmatprep.subr.mxu0 0.0
      %1021 = vmatpush1.msra.mxu0 0.0
      %1022 = vmatprep.subr.mxu0 0.0
      %1023 = vmatpush1.msra.mxu0 0.0
      %1024 = vmatprep.subr.mxu0 0.0
      %1025 = vmatpush1.msra.mxu0 0.0
      %1026 = vmatprep.subr.mxu0 0.0
      %1027 = vmatpush1.msra.mxu0 0.0
      %1028 = vmatprep.subr.mxu0 0.0
      %1029 = vmatpush1.msra.mxu0 0.0
      %1030 = vmatprep.subr.mxu0 0.0
      %1031 = vmatpush1.msra.mxu0 0.0
      %1032 = vmatprep.subr.mxu0 0.0
      %1033 = vmatpush1.msra.mxu0 0.0
      %1034 = vmatprep.subr.mxu0 0.0
      %1035 = vmatpush1.msra.mxu0 0.0
      %1036 = vmatprep.subr.mxu0 0.0
      %1037 = vmatpush1.msra.mxu0 0.0
      %1038 = vmatprep.subr.mxu0 0.0
      %1039 = vmatpush1.msra.mxu0 0.0
      %1040 = vmatprep.subr.mxu0 0.0
      %1041 = vmatpush1.msra.mxu0 0.0
      %1042 = vmatprep.subr.mxu0 0.0
      %1043 = vmatpush1.msra.mxu0 0.0
      %1044 = vmatprep.subr.mxu0 0.0
      %1045 = vmatpush1.msra.mxu0 0.0
      %1046 = vmatprep.subr.mxu0 0.0
      %1047 = vmatpush1.msra.mxu0 0.0
      %1048 = vmatprep.subr.mxu0 0.0
      %1049 = vmatpush1.msra.mxu0 0.0
      %1050 = vmatprep.subr.mxu0 0.0
      %1051 = vmatpush1.msra.mxu0 0.0
      %1052 = vmatprep.subr.mxu0 0.0
      %1053 = vmatpush1.msra.mxu0 0.0
      %1054 = vmatprep.subr.mxu0 0.0
      %1055 = vmatpush1.msra.mxu0 0.0
      %1056 = vmatprep.subr.mxu0 0.0
      %1057 = vmatpush1.msra.mxu0 0.0
      %1058 = vmatprep.mubr.f32.mxu0 0.0
      %1059 = vmatmul.mubr.f32.gmra.mrb[0].mxu0 %v992
      %v1060 = vpop.f32.mrb[0].mxu0
      %v1061 = vadd.f32 %v989, %v1060
      %v1062 = vpop.f32.mrb[0].mxu0
      %v1063 = vadd.f32 %v989, %v1062
      %1064 = vdwg.mxu0
      %1065 = vmatprep.subr.mxu0 0.0
      %1066 = vmatpush1.msra.mxu0 %v411
      %1067 = vmatprep.subr.mxu0 0.0
      %1068 = vmatpush1.msra.mxu0 %v414
      %1069 = vmatprep.subr.mxu0 0.0
      %1070 = vmatpush1.msra.mxu0 0.0
      %1071 = vmatprep.subr.mxu0 0.0
      %1072 = vmatpush1.msra.mxu0 0.0
      %1073 = vmatprep.subr.mxu0 0.0
      %1074 = vmatpush1.msra.mxu0 0.0
      %1075 = vmatprep.subr.mxu0 0.0
      %1076 = vmatpush1.msra.mxu0 0.0
      %1077 = vmatprep.subr.mxu0 0.0
      %1078 = vmatpush1.msra.mxu0 0.0
      %1079 = vmatprep.subr.mxu0 0.0
      %1080 = vmatpush1.msra.mxu0 0.0
      %1081 = vmatprep.subr.mxu0 0.0
      %1082 = vmatpush1.msra.mxu0 0.0
      %1083 = vmatprep.subr.mxu0 0.0
      %1084 = vmatpush1.msra.mxu0 0.0
      %1085 = vmatprep.subr.mxu0 0.0
      %1086 = vmatpush1.msra.mxu0 0.0
      %1087 = vmatprep.subr.mxu0 0.0
      %1088 = vmatpush1.msra.mxu0 0.0
      %1089 = vmatprep.subr.mxu0 0.0
      %1090 = vmatpush1.msra.mxu0 0.0
      %1091 = vmatprep.subr.mxu0 0.0
      %1092 = vmatpush1.msra.mxu0 0.0
      %1093 = vmatprep.subr.mxu0 0.0
      %1094 = vmatpush1.msra.mxu0 0.0
      %1095 = vmatprep.subr.mxu0 0.0
      %1096 = vmatpush1.msra.mxu0 0.0
      %1097 = vmatprep.subr.mxu0 0.0
      %1098 = vmatpush1.msra.mxu0 0.0
      %1099 = vmatprep.subr.mxu0 0.0
      %1100 = vmatpush1.msra.mxu0 0.0
      %1101 = vmatprep.subr.mxu0 0.0
      %1102 = vmatpush1.msra.mxu0 0.0
      %1103 = vmatprep.subr.mxu0 0.0
      %1104 = vmatpush1.msra.mxu0 0.0
      %1105 = vmatprep.subr.mxu0 0.0
      %1106 = vmatpush1.msra.mxu0 0.0
      %1107 = vmatprep.subr.mxu0 0.0
      %1108 = vmatpush1.msra.mxu0 0.0
      %1109 = vmatprep.subr.mxu0 0.0
      %1110 = vmatpush1.msra.mxu0 0.0
      %1111 = vmatprep.subr.mxu0 0.0
      %1112 = vmatpush1.msra.mxu0 0.0
      %1113 = vmatprep.subr.mxu0 0.0
      %1114 = vmatpush1.msra.mxu0 0.0
      %1115 = vmatprep.subr.mxu0 0.0
      %1116 = vmatpush1.msra.mxu0 0.0
      %1117 = vmatprep.subr.mxu0 0.0
      %1118 = vmatpush1.msra.mxu0 0.0
      %1119 = vmatprep.subr.mxu0 0.0
      %1120 = vmatpush1.msra.mxu0 0.0
      %1121 = vmatprep.subr.mxu0 0.0
      %1122 = vmatpush1.msra.mxu0 0.0
      %1123 = vmatprep.subr.mxu0 0.0
      %1124 = vmatpush1.msra.mxu0 0.0
      %1125 = vmatprep.subr.mxu0 0.0
      %1126 = vmatpush1.msra.mxu0 0.0
      %1127 = vmatprep.subr.mxu0 0.0
      %1128 = vmatpush1.msra.mxu0 0.0
      %1129 = vmatprep.mubr.f32.mxu0 0.0
      %1130 = vmatmul.mubr.f32.gmra.mrb[0].mxu0 %v992
      %v1131 = vpop.f32.mrb[0].mxu0
      %v1132 = vadd.f32 %v989, %v1131
      %v1133 = vpop.f32.mrb[0].mxu0
      %1134 = vdwg.mxu0
      %v1135 = vld [vmem:[%s5] sm:$0x7]
      %v1137 = vlaneseq
      %v1138 = vshrl.u32 %v1137, 7
      %v1139 = vsub.s32 0, %v1138
      %v1140 = vrot.slane %v1135, %v1139
      %v1141 = vlaneseq
      %v1142 = vshrl.u32 %v1141, 7
      %v1143 = vsub.s32 1, %v1142
      %v1144 = vrot.slane %v1135, %v1143
      %v1145 = vlaneseq
      %v1146 = vshrl.u32 %v1145, 7
      %v1147 = vsub.s32 2, %v1146
      %v1148 = vrot.slane %v1135, %v1147
      %v1152 = vmul.f32 %v1061, %v1140
      %v1153 = vmul.f32 %v1063, %v1144
      %v1154 = vmul.f32 %v1132, %v1148
      %v1158 = vcombine.low %v1152, %v1153
      %1159 = vrot.lane.b32.xlu0 %v1158, 20
      %v1160 = vpop.permute.xlu0 %1159
      %1161 = vrot.lane.b32.xlu0 %v1154, 20
      %v1162 = vpop.permute.xlu0 %1161
      %v1163 = vrot.slane %v1160, 4
      %v1164 = vsel %vm596, %v1163, %v1160
      %v1165 = vsel %vm596, %v1163, %v1162
      %s1168 = scalar_lea.vmem [#allocation2], 36
      %1169 = vst.msk [vmem:[%s1168] sm:$0xff] %vm603, %v1164
      %1170 = vst.msk [vmem:[%s1168 + $0x8] sm:$0xf] %vm605, %v1165
      %v1171 = vld [vmem:[%s1168] sm:$0xff]
      %v1172 = vld [vmem:[%s1168 + $0x8] sm:$0xf]
      %v1173 = vld [vmem:[%s980] sm:$0xff]
      %v1174 = vld [vmem:[%s980 + $0x8] sm:$0xf]
      %v1175 = vld [vmem:[%s792] sm:$0xff]
      %v1176 = vld [vmem:[%s792 + $0x8] sm:$0xf]
      %v1177 = vld [vmem:[#allocation2] sm:$0xff]
      %v1178 = vld [vmem:[#allocation2 + $0x8] sm:$0xf]
      %v1181 = vcombine.high %v1171, %v1171
      %v1185 = vcombine.low %v1173, %v1173
      %v1186 = vcombine.low %v1174, %v1174
      %1187 = vrot.lane.b32.xlu0 %v1185, 127
      %v1188 = vpop.permute.xlu0 %1187
      %1189 = vrot.lane.b32.xlu0 %v1173, 127
      %v1190 = vpop.permute.xlu0 %1189
      %1191 = vrot.lane.b32.xlu0 %v1186, 127
      %v1192 = vpop.permute.xlu0 %1191
      %v1193 = vsel %vm378, %v1188, %v1190
      %v1194 = vsel %vm378, %v1190, %v1192
      %1198 = vrot.lane.b32.xlu0 %v1171, 127
      %v1199 = vpop.permute.xlu0 %1198
      %1200 = vrot.lane.b32.xlu0 %v1181, 127
      %v1201 = vpop.permute.xlu0 %1200
      %1202 = vrot.lane.b32.xlu0 %v1172, 127
      %v1203 = vpop.permute.xlu0 %1202
      %v1204 = vsel %vm378, %v1199, %v1201
      %v1205 = vsel %vm378, %v1201, %v1203
      %1209 = vrot.lane.b32.xlu0 %v1185, 126
      %v1210 = vpop.permute.xlu0 %1209
      %1211 = vrot.lane.b32.xlu0 %v1173, 126
      %v1212 = vpop.permute.xlu0 %1211
      %1213 = vrot.lane.b32.xlu0 %v1186, 126
      %v1214 = vpop.permute.xlu0 %1213
      %vm1215 = vcmask 1031168
      %v1216 = vsel %vm1215, %v1210, %v1212
      %v1217 = vsel %vm1215, %v1212, %v1214
      %v1223 = vcombine.high %v1175, %v1175
      %1224 = vrot.lane.b32.xlu0 %v1175, 109
      %v1225 = vpop.permute.xlu0 %1224
      %1226 = vrot.lane.b32.xlu0 %v1223, 109
      %v1227 = vpop.permute.xlu0 %1226
      %1228 = vrot.lane.b32.xlu0 %v1176, 109
      %v1229 = vpop.permute.xlu0 %1228
      %v1230 = vsel %vm390, %v1225, %v1227
      %v1231 = vsel %vm390, %v1227, %v1229
      %v1237 = vcombine.low %v1177, %v1177
      %v1238 = vcombine.low %v1178, %v1178
      %1239 = vrot.lane.b32.xlu0 %v1237, 108
      %v1240 = vpop.permute.xlu0 %1239
      %1241 = vrot.lane.b32.xlu0 %v1177, 108
      %v1242 = vpop.permute.xlu0 %1241
      %1243 = vrot.lane.b32.xlu0 %v1238, 108
      %v1244 = vpop.permute.xlu0 %1243
      %v1245 = vsel %vm402, %v1240, %v1242
      %v1246 = vsel %vm402, %v1242, %v1244
      %1250 = vrot.lane.b32.xlu0 %v1175, 108
      %v1251 = vpop.permute.xlu0 %1250
      %1252 = vrot.lane.b32.xlu0 %v1223, 108
      %v1253 = vpop.permute.xlu0 %1252
      %1254 = vrot.lane.b32.xlu0 %v1176, 108
      %v1255 = vpop.permute.xlu0 %1254
      %v1256 = vsel %vm402, %v1251, %v1253
      %v1257 = vsel %vm402, %v1253, %v1255
      %1261 = vrot.lane.b32.xlu0 %v1237, 107
      %v1262 = vpop.permute.xlu0 %1261
      %1263 = vrot.lane.b32.xlu0 %v1177, 107
      %v1264 = vpop.permute.xlu0 %1263
      %1265 = vrot.lane.b32.xlu0 %v1238, 107
      %v1266 = vpop.permute.xlu0 %1265
      %vm1267 = vcmask 875520
      %v1268 = vsel %vm1267, %v1262, %v1264
      %v1269 = vsel %vm1267, %v1264, %v1266
      %1273 = vrot.lane.b32.xlu0 %v1171, 109
      %v1274 = vpop.permute.xlu0 %1273
      %1275 = vrot.lane.b32.xlu0 %v1181, 109
      %v1276 = vpop.permute.xlu0 %1275
      %1277 = vrot.lane.b32.xlu0 %v1172, 109
      %v1278 = vpop.permute.xlu0 %1277
      %v1279 = vsel %vm390, %v1274, %v1276
      %v1280 = vsel %vm390, %v1276, %v1278
      %1284 = vrot.lane.b32.xlu0 %v1185, 108
      %v1285 = vpop.permute.xlu0 %1284
      %1286 = vrot.lane.b32.xlu0 %v1173, 108
      %v1287 = vpop.permute.xlu0 %1286
      %1288 = vrot.lane.b32.xlu0 %v1186, 108
      %v1289 = vpop.permute.xlu0 %1288
      %v1290 = vsel %vm402, %v1285, %v1287
      %v1291 = vsel %vm402, %v1287, %v1289
      %1295 = vrot.lane.b32.xlu0 %v1171, 108
      %v1296 = vpop.permute.xlu0 %1295
      %1297 = vrot.lane.b32.xlu0 %v1181, 108
      %v1298 = vpop.permute.xlu0 %1297
      %1299 = vrot.lane.b32.xlu0 %v1172, 108
      %v1300 = vpop.permute.xlu0 %1299
      %v1301 = vsel %vm402, %v1296, %v1298
      %v1302 = vsel %vm402, %v1298, %v1300
      %1306 = vrot.lane.b32.xlu0 %v1185, 107
      %v1307 = vpop.permute.xlu0 %1306
      %1308 = vrot.lane.b32.xlu0 %v1173, 107
      %v1309 = vpop.permute.xlu0 %1308
      %1310 = vrot.lane.b32.xlu0 %v1186, 107
      %v1311 = vpop.permute.xlu0 %1310
      %v1312 = vsel %vm1267, %v1307, %v1309
      %v1313 = vsel %vm1267, %v1309, %v1311
      %1317 = vrot.lane.b32.xlu0 %v1175, 90
      %v1318 = vpop.permute.xlu0 %1317
      %1319 = vrot.lane.b32.xlu0 %v1223, 90
      %v1320 = vpop.permute.xlu0 %1319
      %1321 = vrot.lane.b32.xlu0 %v1176, 90
      %v1322 = vpop.permute.xlu0 %1321
      %vm1323 = vcmask 736256
      %v1324 = vsel %vm1323, %v1318, %v1320
      %v1325 = vsel %vm1323, %v1320, %v1322
      %1329 = vrot.lane.b32.xlu0 %v1237, 89
      %v1330 = vpop.permute.xlu0 %1329
      %1331 = vrot.lane.b32.xlu0 %v1177, 89
      %v1332 = vpop.permute.xlu0 %1331
      %1333 = vrot.lane.b32.xlu0 %v1238, 89
      %v1334 = vpop.permute.xlu0 %1333
      %vm1335 = vcmask 728064
      %v1336 = vsel %vm1335, %v1330, %v1332
      %v1337 = vsel %vm1335, %v1332, %v1334
      %1341 = vrot.lane.b32.xlu0 %v1175, 89
      %v1342 = vpop.permute.xlu0 %1341
      %1343 = vrot.lane.b32.xlu0 %v1223, 89
      %v1344 = vpop.permute.xlu0 %1343
      %1345 = vrot.lane.b32.xlu0 %v1176, 89
      %v1346 = vpop.permute.xlu0 %1345
      %v1347 = vsel %vm1335, %v1342, %v1344
      %v1348 = vsel %vm1335, %v1344, %v1346
      %1352 = vrot.lane.b32.xlu0 %v1237, 88
      %v1353 = vpop.permute.xlu0 %1352
      %1354 = vrot.lane.b32.xlu0 %v1177, 88
      %v1355 = vpop.permute.xlu0 %1354
      %1356 = vrot.lane.b32.xlu0 %v1238, 88
      %v1357 = vpop.permute.xlu0 %1356
      %vm1358 = vcmask 719872
      %v1359 = vsel %vm1358, %v1353, %v1355
      %v1360 = vsel %vm1358, %v1355, %v1357
      %v1364 = vsel %vm408, %v1171, %v1193
      %v1365 = vsel %vm408, %v1181, %v1194
      %v1366 = vsel %vm408, %v1172, %v1192
      %v1367 = vsel %vm408, %v1204, %v1216
      %v1368 = vsel %vm408, %v1205, %v1217
      %v1369 = vsel %vm408, %v1203, %v1214
      %v1370 = vsel %vm408, %v1230, %v1245
      %v1371 = vsel %vm408, %v1231, %v1246
      %v1372 = vsel %vm408, %v1229, %v1244
      %v1373 = vsel %vm408, %v1256, %v1268
      %v1374 = vsel %vm408, %v1257, %v1269
      %v1375 = vsel %vm408, %v1255, %v1266
      %v1376 = vsel %vm408, %v1279, %v1290
      %v1377 = vsel %vm408, %v1280, %v1291
      %v1378 = vsel %vm408, %v1278, %v1289
      %v1379 = vsel %vm408, %v1301, %v1312
      %v1380 = vsel %vm408, %v1302, %v1313
      %v1381 = vsel %vm408, %v1300, %v1311
      %v1382 = vsel %vm408, %v1324, %v1336
      %v1383 = vsel %vm408, %v1325, %v1337
      %v1384 = vsel %vm408, %v1322, %v1334
      %v1385 = vsel %vm408, %v1347, %v1359
      %v1386 = vsel %vm408, %v1348, %v1360
      %v1387 = vsel %vm408, %v1346, %v1357
      %v1388 = vld [vmem:[%s3] sm:$0xff]
      %v1389 = vld [vmem:[%s4] sm:$0xff]
      %1391 = vset.pattern.permute.xlu0 0
      %1392 = vperm.xlu0 %1391, %v1389
      %v1393 = vpop.permute.xlu0 %1392
      %vm1395 = vcmask 523264
      %v1397 = vsel %vm1395, %v1388, 0
      %1399 = vmatprep.subr.mxu0 %v1365
      %1400 = vmatpush1.msra.mxu0 %v1364
      %1401 = vmatprep.subr.mxu0 %v1368
      %1402 = vmatpush1.msra.mxu0 %v1367
      %1403 = vmatprep.subr.mxu0 %v1371
      %1404 = vmatpush1.msra.mxu0 %v1370
      %1405 = vmatprep.subr.mxu0 %v1374
      %1406 = vmatpush1.msra.mxu0 %v1373
      %1407 = vmatprep.subr.mxu0 %v1377
      %1408 = vmatpush1.msra.mxu0 %v1376
      %1409 = vmatprep.subr.mxu0 %v1380
      %1410 = vmatpush1.msra.mxu0 %v1379
      %1411 = vmatprep.subr.mxu0 %v1383
      %1412 = vmatpush1.msra.mxu0 %v1382
      %1413 = vmatprep.subr.mxu0 %v1386
      %1414 = vmatpush1.msra.mxu0 %v1385
      %1415 = vmatprep.subr.mxu0 0.0
      %1416 = vmatpush1.msra.mxu0 0.0
      %1417 = vmatprep.subr.mxu0 0.0
      %1418 = vmatpush1.msra.mxu0 0.0
      %1419 = vmatprep.subr.mxu0 0.0
      %1420 = vmatpush1.msra.mxu0 0.0
      %1421 = vmatprep.subr.mxu0 0.0
      %1422 = vmatpush1.msra.mxu0 0.0
      %1423 = vmatprep.subr.mxu0 0.0
      %1424 = vmatpush1.msra.mxu0 0.0
      %1425 = vmatprep.subr.mxu0 0.0
      %1426 = vmatpush1.msra.mxu0 0.0
      %1427 = vmatprep.subr.mxu0 0.0
      %1428 = vmatpush1.msra.mxu0 0.0
      %1429 = vmatprep.subr.mxu0 0.0
      %1430 = vmatpush1.msra.mxu0 0.0
      %1431 = vmatprep.subr.mxu0 0.0
      %1432 = vmatpush1.msra.mxu0 0.0
      %1433 = vmatprep.subr.mxu0 0.0
      %1434 = vmatpush1.msra.mxu0 0.0
      %1435 = vmatprep.subr.mxu0 0.0
      %1436 = vmatpush1.msra.mxu0 0.0
      %1437 = vmatprep.subr.mxu0 0.0
      %1438 = vmatpush1.msra.mxu0 0.0
      %1439 = vmatprep.subr.mxu0 0.0
      %1440 = vmatpush1.msra.mxu0 0.0
      %1441 = vmatprep.subr.mxu0 0.0
      %1442 = vmatpush1.msra.mxu0 0.0
      %1443 = vmatprep.subr.mxu0 0.0
      %1444 = vmatpush1.msra.mxu0 0.0
      %1445 = vmatprep.subr.mxu0 0.0
      %1446 = vmatpush1.msra.mxu0 0.0
      %1447 = vmatprep.subr.mxu0 0.0
      %1448 = vmatpush1.msra.mxu0 0.0
      %1449 = vmatprep.subr.mxu0 0.0
      %1450 = vmatpush1.msra.mxu0 0.0
      %1451 = vmatprep.subr.mxu0 0.0
      %1452 = vmatpush1.msra.mxu0 0.0
      %1453 = vmatprep.subr.mxu0 0.0
      %1454 = vmatpush1.msra.mxu0 0.0
      %1455 = vmatprep.subr.mxu0 0.0
      %1456 = vmatpush1.msra.mxu0 0.0
      %1457 = vmatprep.subr.mxu0 0.0
      %1458 = vmatpush1.msra.mxu0 0.0
      %1459 = vmatprep.subr.mxu0 0.0
      %1460 = vmatpush1.msra.mxu0 0.0
      %1461 = vmatprep.subr.mxu0 0.0
      %1462 = vmatpush1.msra.mxu0 0.0
      %1463 = vmatprep.mubr.f32.mxu0 0.0
      %1464 = vmatmul.mubr.f32.gmra.mrb[0].mxu0 %v1397
      %v1465 = vpop.f32.mrb[0].mxu0
      %v1466 = vadd.f32 %v1393, %v1465
      %v1467 = vpop.f32.mrb[0].mxu0
      %v1468 = vadd.f32 %v1393, %v1467
      %1469 = vdwg.mxu0
      %1470 = vmatprep.subr.mxu0 0.0
      %1471 = vmatpush1.msra.mxu0 %v1366
      %1472 = vmatprep.subr.mxu0 0.0
      %1473 = vmatpush1.msra.mxu0 %v1369
      %1474 = vmatprep.subr.mxu0 0.0
      %1475 = vmatpush1.msra.mxu0 %v1372
      %1476 = vmatprep.subr.mxu0 0.0
      %1477 = vmatpush1.msra.mxu0 %v1375
      %1478 = vmatprep.subr.mxu0 0.0
      %1479 = vmatpush1.msra.mxu0 %v1378
      %1480 = vmatprep.subr.mxu0 0.0
      %1481 = vmatpush1.msra.mxu0 %v1381
      %1482 = vmatprep.subr.mxu0 0.0
      %1483 = vmatpush1.msra.mxu0 %v1384
      %1484 = vmatprep.subr.mxu0 0.0
      %1485 = vmatpush1.msra.mxu0 %v1387
      %1486 = vmatprep.subr.mxu0 0.0
      %1487 = vmatpush1.msra.mxu0 0.0
      %1488 = vmatprep.subr.mxu0 0.0
      %1489 = vmatpush1.msra.mxu0 0.0
      %1490 = vmatprep.subr.mxu0 0.0
      %1491 = vmatpush1.msra.mxu0 0.0
      %1492 = vmatprep.subr.mxu0 0.0
      %1493 = vmatpush1.msra.mxu0 0.0
      %1494 = vmatprep.subr.mxu0 0.0
      %1495 = vmatpush1.msra.mxu0 0.0
      %1496 = vmatprep.subr.mxu0 0.0
      %1497 = vmatpush1.msra.mxu0 0.0
      %1498 = vmatprep.subr.mxu0 0.0
      %1499 = vmatpush1.msra.mxu0 0.0
      %1500 = vmatprep.subr.mxu0 0.0
      %1501 = vmatpush1.msra.mxu0 0.0
      %1502 = vmatprep.subr.mxu0 0.0
      %1503 = vmatpush1.msra.mxu0 0.0
      %1504 = vmatprep.subr.mxu0 0.0
      %1505 = vmatpush1.msra.mxu0 0.0
      %1506 = vmatprep.subr.mxu0 0.0
      %1507 = vmatpush1.msra.mxu0 0.0
      %1508 = vmatprep.subr.mxu0 0.0
      %1509 = vmatpush1.msra.mxu0 0.0
      %1510 = vmatprep.subr.mxu0 0.0
      %1511 = vmatpush1.msra.mxu0 0.0
      %1512 = vmatprep.subr.mxu0 0.0
      %1513 = vmatpush1.msra.mxu0 0.0
      %1514 = vmatprep.subr.mxu0 0.0
      %1515 = vmatpush1.msra.mxu0 0.0
      %1516 = vmatprep.subr.mxu0 0.0
      %1517 = vmatpush1.msra.mxu0 0.0
      %1518 = vmatprep.subr.mxu0 0.0
      %1519 = vmatpush1.msra.mxu0 0.0
      %1520 = vmatprep.subr.mxu0 0.0
      %1521 = vmatpush1.msra.mxu0 0.0
      %1522 = vmatprep.subr.mxu0 0.0
      %1523 = vmatpush1.msra.mxu0 0.0
      %1524 = vmatprep.subr.mxu0 0.0
      %1525 = vmatpush1.msra.mxu0 0.0
      %1526 = vmatprep.subr.mxu0 0.0
      %1527 = vmatpush1.msra.mxu0 0.0
      %1528 = vmatprep.subr.mxu0 0.0
      %1529 = vmatpush1.msra.mxu0 0.0
      %1530 = vmatprep.subr.mxu0 0.0
      %1531 = vmatpush1.msra.mxu0 0.0
      %1532 = vmatprep.subr.mxu0 0.0
      %1533 = vmatpush1.msra.mxu0 0.0
      %1534 = vmatprep.mubr.f32.mxu0 0.0
      %1535 = vmatmul.mubr.f32.gmra.mrb[0].mxu0 %v1397
      %v1536 = vpop.f32.mrb[0].mxu0
      %v1537 = vadd.f32 %v1393, %v1536
      %v1538 = vpop.f32.mrb[0].mxu0
      %1539 = vdwg.mxu0
      %v1540 = vpack.c.bf16 %v1466, %v1466
      %v1541 = vpack.c.bf16 %v1468, %v1468
      %v1542 = vpack.c.bf16 %v1537, %v1537
      %v1546 = vunpack.c.l.b16 %v1540
      %v1547 = vunpack.c.l.b16 %v1541
      %v1548 = vunpack.c.l.b16 %v1542
      %v1549 = vpack.c.b16 %v1547, %v1546
      %v1550 = vpack.c.b16 %v1548, %v1548
      %1553 = vst [vmem:[%s345] sm:$0xff] %v1549
      %vm1554 = vcmask 543744
      %1555 = vst.msk [vmem:[%s345 + $0x8] sm:$0xf] %vm1554, %v1550
      %v1556 = vld [vmem:[%s6] sm:$0x7]
      %v1558 = vlaneseq
      %v1559 = vshrl.u32 %v1558, 7
      %v1560 = vsub.s32 0, %v1559
      %v1561 = vrot.slane %v1556, %v1560
      %v1562 = vlaneseq
      %v1563 = vshrl.u32 %v1562, 7
      %v1564 = vsub.s32 1, %v1563
      %v1565 = vrot.slane %v1556, %v1564
      %v1566 = vlaneseq
      %v1567 = vshrl.u32 %v1566, 7
      %v1568 = vsub.s32 2, %v1567
      %v1569 = vrot.slane %v1556, %v1568
      %v1573 = vmul.f32 %v1466, %v1561
      %v1574 = vmul.f32 %v1468, %v1565
      %v1575 = vmul.f32 %v1537, %v1569
      %v1576 = vadd.f32 %v1573, %v1574
      %vm1577 = vcmask 547840
      %v1578 = vsel %vm1577, %v1575, 0.0
      %v1579 = vadd.f32 %v1576, %v1578
      %1580 = vadd.xlane.f32.xlu0 %v1579
      %v1581 = vpop.xlane.xlu0 %1580
      %v1582 = vadd.f32 %v1581, 0.0
      %v1583 = vmul.f32 %v1573, %v1466
      %v1584 = vmul.f32 %v1574, %v1468
      %v1585 = vmul.f32 %v1575, %v1537
      %v1586 = vadd.f32 %v1583, %v1584
      %v1587 = vsel %vm1577, %v1585, 0.0
      %v1588 = vadd.f32 %v1586, %v1587
      %1589 = vadd.xlane.f32.xlu0 %v1588
      %v1590 = vpop.xlane.xlu0 %1589
      %v1591 = vadd.f32 %v1590, 0.0
      %s1592 = scalar_lea.vmem %s3, 8
      %v1593 = vld [vmem:[%s1592] sm:$0xff]
      %v1594 = vld [vmem:[%s4] sm:$0xff]
      %1596 = vset.pattern.permute.xlu0 0
      %1597 = vperm.xlu0 %1596, %v1594
      %v1598 = vpop.permute.xlu0 %1597
      %v1601 = vsel %vm1395, %v1593, 0
      %1603 = vmatprep.subr.mxu0 %v1365
      %1604 = vmatpush1.msra.mxu0 %v1364
      %1605 = vmatprep.subr.mxu0 %v1368
      %1606 = vmatpush1.msra.mxu0 %v1367
      %1607 = vmatprep.subr.mxu0 %v1371
      %1608 = vmatpush1.msra.mxu0 %v1370
      %1609 = vmatprep.subr.mxu0 %v1374
      %1610 = vmatpush1.msra.mxu0 %v1373
      %1611 = vmatprep.subr.mxu0 %v1377
      %1612 = vmatpush1.msra.mxu0 %v1376
      %1613 = vmatprep.subr.mxu0 %v1380
      %1614 = vmatpush1.msra.mxu0 %v1379
      %1615 = vmatprep.subr.mxu0 %v1383
      %1616 = vmatpush1.msra.mxu0 %v1382
      %1617 = vmatprep.subr.mxu0 %v1386
      %1618 = vmatpush1.msra.mxu0 %v1385
      %1619 = vmatprep.subr.mxu0 0.0
      %1620 = vmatpush1.msra.mxu0 0.0
      %1621 = vmatprep.subr.mxu0 0.0
      %1622 = vmatpush1.msra.mxu0 0.0
      %1623 = vmatprep.subr.mxu0 0.0
      %1624 = vmatpush1.msra.mxu0 0.0
      %1625 = vmatprep.subr.mxu0 0.0
      %1626 = vmatpush1.msra.mxu0 0.0
      %1627 = vmatprep.subr.mxu0 0.0
      %1628 = vmatpush1.msra.mxu0 0.0
      %1629 = vmatprep.subr.mxu0 0.0
      %1630 = vmatpush1.msra.mxu0 0.0
      %1631 = vmatprep.subr.mxu0 0.0
      %1632 = vmatpush1.msra.mxu0 0.0
      %1633 = vmatprep.subr.mxu0 0.0
      %1634 = vmatpush1.msra.mxu0 0.0
      %1635 = vmatprep.subr.mxu0 0.0
      %1636 = vmatpush1.msra.mxu0 0.0
      %1637 = vmatprep.subr.mxu0 0.0
      %1638 = vmatpush1.msra.mxu0 0.0
      %1639 = vmatprep.subr.mxu0 0.0
      %1640 = vmatpush1.msra.mxu0 0.0
      %1641 = vmatprep.subr.mxu0 0.0
      %1642 = vmatpush1.msra.mxu0 0.0
      %1643 = vmatprep.subr.mxu0 0.0
      %1644 = vmatpush1.msra.mxu0 0.0
      %1645 = vmatprep.subr.mxu0 0.0
      %1646 = vmatpush1.msra.mxu0 0.0
      %1647 = vmatprep.subr.mxu0 0.0
      %1648 = vmatpush1.msra.mxu0 0.0
      %1649 = vmatprep.subr.mxu0 0.0
      %1650 = vmatpush1.msra.mxu0 0.0
      %1651 = vmatprep.subr.mxu0 0.0
      %1652 = vmatpush1.msra.mxu0 0.0
      %1653 = vmatprep.subr.mxu0 0.0
      %1654 = vmatpush1.msra.mxu0 0.0
      %1655 = vmatprep.subr.mxu0 0.0
      %1656 = vmatpush1.msra.mxu0 0.0
      %1657 = vmatprep.subr.mxu0 0.0
      %1658 = vmatpush1.msra.mxu0 0.0
      %1659 = vmatprep.subr.mxu0 0.0
      %1660 = vmatpush1.msra.mxu0 0.0
      %1661 = vmatprep.subr.mxu0 0.0
      %1662 = vmatpush1.msra.mxu0 0.0
      %1663 = vmatprep.subr.mxu0 0.0
      %1664 = vmatpush1.msra.mxu0 0.0
      %1665 = vmatprep.subr.mxu0 0.0
      %1666 = vmatpush1.msra.mxu0 0.0
      %1667 = vmatprep.mubr.f32.mxu0 0.0
      %1668 = vmatmul.mubr.f32.gmra.mrb[0].mxu0 %v1601
      %v1669 = vpop.f32.mrb[0].mxu0
      %v1670 = vadd.f32 %v1598, %v1669
      %v1671 = vpop.f32.mrb[0].mxu0
      %v1672 = vadd.f32 %v1598, %v1671
      %1673 = vdwg.mxu0
      %1674 = vmatprep.subr.mxu0 0.0
      %1675 = vmatpush1.msra.mxu0 %v1366
      %1676 = vmatprep.subr.mxu0 0.0
      %1677 = vmatpush1.msra.mxu0 %v1369
      %1678 = vmatprep.subr.mxu0 0.0
      %1679 = vmatpush1.msra.mxu0 %v1372
      %1680 = vmatprep.subr.mxu0 0.0
      %1681 = vmatpush1.msra.mxu0 %v1375
      %1682 = vmatprep.subr.mxu0 0.0
      %1683 = vmatpush1.msra.mxu0 %v1378
      %1684 = vmatprep.subr.mxu0 0.0
      %1685 = vmatpush1.msra.mxu0 %v1381
      %1686 = vmatprep.subr.mxu0 0.0
      %1687 = vmatpush1.msra.mxu0 %v1384
      %1688 = vmatprep.subr.mxu0 0.0
      %1689 = vmatpush1.msra.mxu0 %v1387
      %1690 = vmatprep.subr.mxu0 0.0
      %1691 = vmatpush1.msra.mxu0 0.0
      %1692 = vmatprep.subr.mxu0 0.0
      %1693 = vmatpush1.msra.mxu0 0.0
      %1694 = vmatprep.subr.mxu0 0.0
      %1695 = vmatpush1.msra.mxu0 0.0
      %1696 = vmatprep.subr.mxu0 0.0
      %1697 = vmatpush1.msra.mxu0 0.0
      %1698 = vmatprep.subr.mxu0 0.0
      %1699 = vmatpush1.msra.mxu0 0.0
      %1700 = vmatprep.subr.mxu0 0.0
      %1701 = vmatpush1.msra.mxu0 0.0
      %1702 = vmatprep.subr.mxu0 0.0
      %1703 = vmatpush1.msra.mxu0 0.0
      %1704 = vmatprep.subr.mxu0 0.0
      %1705 = vmatpush1.msra.mxu0 0.0
      %1706 = vmatprep.subr.mxu0 0.0
      %1707 = vmatpush1.msra.mxu0 0.0
      %1708 = vmatprep.subr.mxu0 0.0
      %1709 = vmatpush1.msra.mxu0 0.0
      %1710 = vmatprep.subr.mxu0 0.0
      %1711 = vmatpush1.msra.mxu0 0.0
      %1712 = vmatprep.subr.mxu0 0.0
      %1713 = vmatpush1.msra.mxu0 0.0
      %1714 = vmatprep.subr.mxu0 0.0
      %1715 = vmatpush1.msra.mxu0 0.0
      %1716 = vmatprep.subr.mxu0 0.0
      %1717 = vmatpush1.msra.mxu0 0.0
      %1718 = vmatprep.subr.mxu0 0.0
      %1719 = vmatpush1.msra.mxu0 0.0
      %1720 = vmatprep.subr.mxu0 0.0
      %1721 = vmatpush1.msra.mxu0 0.0
      %1722 = vmatprep.subr.mxu0 0.0
      %1723 = vmatpush1.msra.mxu0 0.0
      %1724 = vmatprep.subr.mxu0 0.0
      %1725 = vmatpush1.msra.mxu0 0.0
      %1726 = vmatprep.subr.mxu0 0.0
      %1727 = vmatpush1.msra.mxu0 0.0
      %1728 = vmatprep.subr.mxu0 0.0
      %1729 = vmatpush1.msra.mxu0 0.0
      %1730 = vmatprep.subr.mxu0 0.0
      %1731 = vmatpush1.msra.mxu0 0.0
      %1732 = vmatprep.subr.mxu0 0.0
      %1733 = vmatpush1.msra.mxu0 0.0
      %1734 = vmatprep.subr.mxu0 0.0
      %1735 = vmatpush1.msra.mxu0 0.0
      %1736 = vmatprep.subr.mxu0 0.0
      %1737 = vmatpush1.msra.mxu0 0.0
      %1738 = vmatprep.mubr.f32.mxu0 0.0
      %1739 = vmatmul.mubr.f32.gmra.mrb[0].mxu0 %v1601
      %v1740 = vpop.f32.mrb[0].mxu0
      %v1741 = vadd.f32 %v1598, %v1740
      %v1742 = vpop.f32.mrb[0].mxu0
      %1743 = vdwg.mxu0
      %v1744 = vpack.c.bf16 %v1670, %v1670
      %v1745 = vpack.c.bf16 %v1672, %v1672
      %v1746 = vpack.c.bf16 %v1741, %v1741
      %v1750 = vunpack.c.l.b16 %v1744
      %v1751 = vunpack.c.l.b16 %v1745
      %v1752 = vunpack.c.l.b16 %v1746
      %v1753 = vpack.c.b16 %v1751, %v1750
      %v1754 = vpack.c.b16 %v1752, %v1752
      %s1757 = scalar_lea.vmem %s345, 12
      %1758 = vst [vmem:[%s1757] sm:$0xff] %v1753
      %1759 = vst.msk [vmem:[%s1757 + $0x8] sm:$0xf] %vm1554, %v1754
      %v1760 = vld [vmem:[%s6] sm:$0x7]
      %v1762 = vlaneseq
      %v1763 = vshrl.u32 %v1762, 7
      %v1764 = vsub.s32 0, %v1763
      %v1765 = vrot.slane %v1760, %v1764
      %v1766 = vlaneseq
      %v1767 = vshrl.u32 %v1766, 7
      %v1768 = vsub.s32 1, %v1767
      %v1769 = vrot.slane %v1760, %v1768
      %v1770 = vlaneseq
      %v1771 = vshrl.u32 %v1770, 7
      %v1772 = vsub.s32 2, %v1771
      %v1773 = vrot.slane %v1760, %v1772
      %v1777 = vmul.f32 %v1670, %v1765
      %v1778 = vmul.f32 %v1672, %v1769
      %v1779 = vmul.f32 %v1741, %v1773
      %v1780 = vadd.f32 %v1777, %v1778
      %v1781 = vsel %vm1577, %v1779, 0.0
      %v1782 = vadd.f32 %v1780, %v1781
      %1783 = vadd.xlane.f32.xlu0 %v1782
      %v1784 = vpop.xlane.xlu0 %1783
      %v1785 = vadd.f32 %v1582, %v1784
      %v1786 = vmul.f32 %v1777, %v1670
      %v1787 = vmul.f32 %v1778, %v1672
      %v1788 = vmul.f32 %v1779, %v1741
      %v1789 = vadd.f32 %v1786, %v1787
      %v1790 = vsel %vm1577, %v1788, 0.0
      %v1791 = vadd.f32 %v1789, %v1790
      %1792 = vadd.xlane.f32.xlu0 %v1791
      %v1793 = vpop.xlane.xlu0 %1792
      %v1794 = vadd.f32 %v1591, %v1793
      %s1795 = scalar_lea.vmem %s3, 16
      %v1796 = vld [vmem:[%s1795] sm:$0xff]
      %v1797 = vld [vmem:[%s4] sm:$0xff]
      %1799 = vset.pattern.permute.xlu0 0
      %1800 = vperm.xlu0 %1799, %v1797
      %v1801 = vpop.permute.xlu0 %1800
      %v1804 = vsel %vm1395, %v1796, 0
      %1806 = vmatprep.subr.mxu0 %v1365
      %1807 = vmatpush1.msra.mxu0 %v1364
      %1808 = vmatprep.subr.mxu0 %v1368
      %1809 = vmatpush1.msra.mxu0 %v1367
      %1810 = vmatprep.subr.mxu0 %v1371
      %1811 = vmatpush1.msra.mxu0 %v1370
      %1812 = vmatprep.subr.mxu0 %v1374
      %1813 = vmatpush1.msra.mxu0 %v1373
      %1814 = vmatprep.subr.mxu0 %v1377
      %1815 = vmatpush1.msra.mxu0 %v1376
      %1816 = vmatprep.subr.mxu0 %v1380
      %1817 = vmatpush1.msra.mxu0 %v1379
      %1818 = vmatprep.subr.mxu0 %v1383
      %1819 = vmatpush1.msra.mxu0 %v1382
      %1820 = vmatprep.subr.mxu0 %v1386
      %1821 = vmatpush1.msra.mxu0 %v1385
      %1822 = vmatprep.subr.mxu0 0.0
      %1823 = vmatpush1.msra.mxu0 0.0
      %1824 = vmatprep.subr.mxu0 0.0
      %1825 = vmatpush1.msra.mxu0 0.0
      %1826 = vmatprep.subr.mxu0 0.0
      %1827 = vmatpush1.msra.mxu0 0.0
      %1828 = vmatprep.subr.mxu0 0.0
      %1829 = vmatpush1.msra.mxu0 0.0
      %1830 = vmatprep.subr.mxu0 0.0
      %1831 = vmatpush1.msra.mxu0 0.0
      %1832 = vmatprep.subr.mxu0 0.0
      %1833 = vmatpush1.msra.mxu0 0.0
      %1834 = vmatprep.subr.mxu0 0.0
      %1835 = vmatpush1.msra.mxu0 0.0
      %1836 = vmatprep.subr.mxu0 0.0
      %1837 = vmatpush1.msra.mxu0 0.0
      %1838 = vmatprep.subr.mxu0 0.0
      %1839 = vmatpush1.msra.mxu0 0.0
      %1840 = vmatprep.subr.mxu0 0.0
      %1841 = vmatpush1.msra.mxu0 0.0
      %1842 = vmatprep.subr.mxu0 0.0
      %1843 = vmatpush1.msra.mxu0 0.0
      %1844 = vmatprep.subr.mxu0 0.0
      %1845 = vmatpush1.msra.mxu0 0.0
      %1846 = vmatprep.subr.mxu0 0.0
      %1847 = vmatpush1.msra.mxu0 0.0
      %1848 = vmatprep.subr.mxu0 0.0
      %1849 = vmatpush1.msra.mxu0 0.0
      %1850 = vmatprep.subr.mxu0 0.0
      %1851 = vmatpush1.msra.mxu0 0.0
      %1852 = vmatprep.subr.mxu0 0.0
      %1853 = vmatpush1.msra.mxu0 0.0
      %1854 = vmatprep.subr.mxu0 0.0
      %1855 = vmatpush1.msra.mxu0 0.0
      %1856 = vmatprep.subr.mxu0 0.0
      %1857 = vmatpush1.msra.mxu0 0.0
      %1858 = vmatprep.subr.mxu0 0.0
      %1859 = vmatpush1.msra.mxu0 0.0
      %1860 = vmatprep.subr.mxu0 0.0
      %1861 = vmatpush1.msra.mxu0 0.0
      %1862 = vmatprep.subr.mxu0 0.0
      %1863 = vmatpush1.msra.mxu0 0.0
      %1864 = vmatprep.subr.mxu0 0.0
      %1865 = vmatpush1.msra.mxu0 0.0
      %1866 = vmatprep.subr.mxu0 0.0
      %1867 = vmatpush1.msra.mxu0 0.0
      %1868 = vmatprep.subr.mxu0 0.0
      %1869 = vmatpush1.msra.mxu0 0.0
      %1870 = vmatprep.mubr.f32.mxu0 0.0
      %1871 = vmatmul.mubr.f32.gmra.mrb[0].mxu0 %v1804
      %v1872 = vpop.f32.mrb[0].mxu0
      %v1873 = vadd.f32 %v1801, %v1872
      %v1874 = vpop.f32.mrb[0].mxu0
      %v1875 = vadd.f32 %v1801, %v1874
      %1876 = vdwg.mxu0
      %1877 = vmatprep.subr.mxu0 0.0
      %1878 = vmatpush1.msra.mxu0 %v1366
      %1879 = vmatprep.subr.mxu0 0.0
      %1880 = vmatpush1.msra.mxu0 %v1369
      %1881 = vmatprep.subr.mxu0 0.0
      %1882 = vmatpush1.msra.mxu0 %v1372
      %1883 = vmatprep.subr.mxu0 0.0
      %1884 = vmatpush1.msra.mxu0 %v1375
      %1885 = vmatprep.subr.mxu0 0.0
      %1886 = vmatpush1.msra.mxu0 %v1378
      %1887 = vmatprep.subr.mxu0 0.0
      %1888 = vmatpush1.msra.mxu0 %v1381
      %1889 = vmatprep.subr.mxu0 0.0
      %1890 = vmatpush1.msra.mxu0 %v1384
      %1891 = vmatprep.subr.mxu0 0.0
      %1892 = vmatpush1.msra.mxu0 %v1387
      %1893 = vmatprep.subr.mxu0 0.0
      %1894 = vmatpush1.msra.mxu0 0.0
      %1895 = vmatprep.subr.mxu0 0.0
      %1896 = vmatpush1.msra.mxu0 0.0
      %1897 = vmatprep.subr.mxu0 0.0
      %1898 = vmatpush1.msra.mxu0 0.0
      %1899 = vmatprep.subr.mxu0 0.0
      %1900 = vmatpush1.msra.mxu0 0.0
      %1901 = vmatprep.subr.mxu0 0.0
      %1902 = vmatpush1.msra.mxu0 0.0
      %1903 = vmatprep.subr.mxu0 0.0
      %1904 = vmatpush1.msra.mxu0 0.0
      %1905 = vmatprep.subr.mxu0 0.0
      %1906 = vmatpush1.msra.mxu0 0.0
      %1907 = vmatprep.subr.mxu0 0.0
      %1908 = vmatpush1.msra.mxu0 0.0
      %1909 = vmatprep.subr.mxu0 0.0
      %1910 = vmatpush1.msra.mxu0 0.0
      %1911 = vmatprep.subr.mxu0 0.0
      %1912 = vmatpush1.msra.mxu0 0.0
      %1913 = vmatprep.subr.mxu0 0.0
      %1914 = vmatpush1.msra.mxu0 0.0
      %1915 = vmatprep.subr.mxu0 0.0
      %1916 = vmatpush1.msra.mxu0 0.0
      %1917 = vmatprep.subr.mxu0 0.0
      %1918 = vmatpush1.msra.mxu0 0.0
      %1919 = vmatprep.subr.mxu0 0.0
      %1920 = vmatpush1.msra.mxu0 0.0
      %1921 = vmatprep.subr.mxu0 0.0
      %1922 = vmatpush1.msra.mxu0 0.0
      %1923 = vmatprep.subr.mxu0 0.0
      %1924 = vmatpush1.msra.mxu0 0.0
      %1925 = vmatprep.subr.mxu0 0.0
      %1926 = vmatpush1.msra.mxu0 0.0
      %1927 = vmatprep.subr.mxu0 0.0
      %1928 = vmatpush1.msra.mxu0 0.0
      %1929 = vmatprep.subr.mxu0 0.0
      %1930 = vmatpush1.msra.mxu0 0.0
      %1931 = vmatprep.subr.mxu0 0.0
      %1932 = vmatpush1.msra.mxu0 0.0
      %1933 = vmatprep.subr.mxu0 0.0
      %1934 = vmatpush1.msra.mxu0 0.0
      %1935 = vmatprep.subr.mxu0 0.0
      %1936 = vmatpush1.msra.mxu0 0.0
      %1937 = vmatprep.subr.mxu0 0.0
      %1938 = vmatpush1.msra.mxu0 0.0
      %1939 = vmatprep.subr.mxu0 0.0
      %1940 = vmatpush1.msra.mxu0 0.0
      %1941 = vmatprep.mubr.f32.mxu0 0.0
      %1942 = vmatmul.mubr.f32.gmra.mrb[0].mxu0 %v1804
      %v1943 = vpop.f32.mrb[0].mxu0
      %v1944 = vadd.f32 %v1801, %v1943
      %v1945 = vpop.f32.mrb[0].mxu0
      %1946 = vdwg.mxu0
      %v1947 = vpack.c.bf16 %v1873, %v1873
      %v1948 = vpack.c.bf16 %v1875, %v1875
      %v1949 = vpack.c.bf16 %v1944, %v1944
      %v1953 = vunpack.c.l.b16 %v1947
      %v1954 = vunpack.c.l.b16 %v1948
      %v1955 = vunpack.c.l.b16 %v1949
      %v1956 = vpack.c.b16 %v1954, %v1953
      %v1957 = vpack.c.b16 %v1955, %v1955
      %s1960 = scalar_lea.vmem %s345, 24
      %1961 = vst [vmem:[%s1960] sm:$0xff] %v1956
      %1962 = vst.msk [vmem:[%s1960 + $0x8] sm:$0xf] %vm1554, %v1957
      %v1963 = vld [vmem:[%s6] sm:$0x7]
      %v1965 = vlaneseq
      %v1966 = vshrl.u32 %v1965, 7
      %v1967 = vsub.s32 0, %v1966
      %v1968 = vrot.slane %v1963, %v1967
      %v1969 = vlaneseq
      %v1970 = vshrl.u32 %v1969, 7
      %v1971 = vsub.s32 1, %v1970
      %v1972 = vrot.slane %v1963, %v1971
      %v1973 = vlaneseq
      %v1974 = vshrl.u32 %v1973, 7
      %v1975 = vsub.s32 2, %v1974
      %v1976 = vrot.slane %v1963, %v1975
      %v1980 = vmul.f32 %v1873, %v1968
      %v1981 = vmul.f32 %v1875, %v1972
      %v1982 = vmul.f32 %v1944, %v1976
      %v1983 = vadd.f32 %v1980, %v1981
      %v1984 = vsel %vm1577, %v1982, 0.0
      %v1985 = vadd.f32 %v1983, %v1984
      %1986 = vadd.xlane.f32.xlu0 %v1985
      %v1987 = vpop.xlane.xlu0 %1986
      %v1988 = vadd.f32 %v1785, %v1987
      %v1989 = vmul.f32 %v1980, %v1873
      %v1990 = vmul.f32 %v1981, %v1875
      %v1991 = vmul.f32 %v1982, %v1944
      %v1992 = vadd.f32 %v1989, %v1990
      %v1993 = vsel %vm1577, %v1991, 0.0
      %v1994 = vadd.f32 %v1992, %v1993
      %1995 = vadd.xlane.f32.xlu0 %v1994
      %v1996 = vpop.xlane.xlu0 %1995
      %v1997 = vadd.f32 %v1794, %v1996
      %s1998 = scalar_lea.vmem %s3, 24
      %v1999 = vld [vmem:[%s1998] sm:$0xff]
      %v2000 = vld [vmem:[%s4] sm:$0xff]
      %2002 = vset.pattern.permute.xlu0 0
      %2003 = vperm.xlu0 %2002, %v2000
      %v2004 = vpop.permute.xlu0 %2003
      %v2007 = vsel %vm1395, %v1999, 0
      %2009 = vmatprep.subr.mxu0 %v1365
      %2010 = vmatpush1.msra.mxu0 %v1364
      %2011 = vmatprep.subr.mxu0 %v1368
      %2012 = vmatpush1.msra.mxu0 %v1367
      %2013 = vmatprep.subr.mxu0 %v1371
      %2014 = vmatpush1.msra.mxu0 %v1370
      %2015 = vmatprep.subr.mxu0 %v1374
      %2016 = vmatpush1.msra.mxu0 %v1373
      %2017 = vmatprep.subr.mxu0 %v1377
      %2018 = vmatpush1.msra.mxu0 %v1376
      %2019 = vmatprep.subr.mxu0 %v1380
      %2020 = vmatpush1.msra.mxu0 %v1379
      %2021 = vmatprep.subr.mxu0 %v1383
      %2022 = vmatpush1.msra.mxu0 %v1382
      %2023 = vmatprep.subr.mxu0 %v1386
      %2024 = vmatpush1.msra.mxu0 %v1385
      %2025 = vmatprep.subr.mxu0 0.0
      %2026 = vmatpush1.msra.mxu0 0.0
      %2027 = vmatprep.subr.mxu0 0.0
      %2028 = vmatpush1.msra.mxu0 0.0
      %2029 = vmatprep.subr.mxu0 0.0
      %2030 = vmatpush1.msra.mxu0 0.0
      %2031 = vmatprep.subr.mxu0 0.0
      %2032 = vmatpush1.msra.mxu0 0.0
      %2033 = vmatprep.subr.mxu0 0.0
      %2034 = vmatpush1.msra.mxu0 0.0
      %2035 = vmatprep.subr.mxu0 0.0
      %2036 = vmatpush1.msra.mxu0 0.0
      %2037 = vmatprep.subr.mxu0 0.0
      %2038 = vmatpush1.msra.mxu0 0.0
      %2039 = vmatprep.subr.mxu0 0.0
      %2040 = vmatpush1.msra.mxu0 0.0
      %2041 = vmatprep.subr.mxu0 0.0
      %2042 = vmatpush1.msra.mxu0 0.0
      %2043 = vmatprep.subr.mxu0 0.0
      %2044 = vmatpush1.msra.mxu0 0.0
      %2045 = vmatprep.subr.mxu0 0.0
      %2046 = vmatpush1.msra.mxu0 0.0
      %2047 = vmatprep.subr.mxu0 0.0
      %2048 = vmatpush1.msra.mxu0 0.0
      %2049 = vmatprep.subr.mxu0 0.0
      %2050 = vmatpush1.msra.mxu0 0.0
      %2051 = vmatprep.subr.mxu0 0.0
      %2052 = vmatpush1.msra.mxu0 0.0
      %2053 = vmatprep.subr.mxu0 0.0
      %2054 = vmatpush1.msra.mxu0 0.0
      %2055 = vmatprep.subr.mxu0 0.0
      %2056 = vmatpush1.msra.mxu0 0.0
      %2057 = vmatprep.subr.mxu0 0.0
      %2058 = vmatpush1.msra.mxu0 0.0
      %2059 = vmatprep.subr.mxu0 0.0
      %2060 = vmatpush1.msra.mxu0 0.0
      %2061 = vmatprep.subr.mxu0 0.0
      %2062 = vmatpush1.msra.mxu0 0.0
      %2063 = vmatprep.subr.mxu0 0.0
      %2064 = vmatpush1.msra.mxu0 0.0
      %2065 = vmatprep.subr.mxu0 0.0
      %2066 = vmatpush1.msra.mxu0 0.0
      %2067 = vmatprep.subr.mxu0 0.0
      %2068 = vmatpush1.msra.mxu0 0.0
      %2069 = vmatprep.subr.mxu0 0.0
      %2070 = vmatpush1.msra.mxu0 0.0
      %2071 = vmatprep.subr.mxu0 0.0
      %2072 = vmatpush1.msra.mxu0 0.0
      %2073 = vmatprep.mubr.f32.mxu0 0.0
      %2074 = vmatmul.mubr.f32.gmra.mrb[0].mxu0 %v2007
      %v2075 = vpop.f32.mrb[0].mxu0
      %v2076 = vadd.f32 %v2004, %v2075
      %v2077 = vpop.f32.mrb[0].mxu0
      %v2078 = vadd.f32 %v2004, %v2077
      %2079 = vdwg.mxu0
      %2080 = vmatprep.subr.mxu0 0.0
      %2081 = vmatpush1.msra.mxu0 %v1366
      %2082 = vmatprep.subr.mxu0 0.0
      %2083 = vmatpush1.msra.mxu0 %v1369
      %2084 = vmatprep.subr.mxu0 0.0
      %2085 = vmatpush1.msra.mxu0 %v1372
      %2086 = vmatprep.subr.mxu0 0.0
      %2087 = vmatpush1.msra.mxu0 %v1375
      %2088 = vmatprep.subr.mxu0 0.0
      %2089 = vmatpush1.msra.mxu0 %v1378
      %2090 = vmatprep.subr.mxu0 0.0
      %2091 = vmatpush1.msra.mxu0 %v1381
      %2092 = vmatprep.subr.mxu0 0.0
      %2093 = vmatpush1.msra.mxu0 %v1384
      %2094 = vmatprep.subr.mxu0 0.0
      %2095 = vmatpush1.msra.mxu0 %v1387
      %2096 = vmatprep.subr.mxu0 0.0
      %2097 = vmatpush1.msra.mxu0 0.0
      %2098 = vmatprep.subr.mxu0 0.0
      %2099 = vmatpush1.msra.mxu0 0.0
      %2100 = vmatprep.subr.mxu0 0.0
      %2101 = vmatpush1.msra.mxu0 0.0
      %2102 = vmatprep.subr.mxu0 0.0
      %2103 = vmatpush1.msra.mxu0 0.0
      %2104 = vmatprep.subr.mxu0 0.0
      %2105 = vmatpush1.msra.mxu0 0.0
      %2106 = vmatprep.subr.mxu0 0.0
      %2107 = vmatpush1.msra.mxu0 0.0
      %2108 = vmatprep.subr.mxu0 0.0
      %2109 = vmatpush1.msra.mxu0 0.0
      %2110 = vmatprep.subr.mxu0 0.0
      %2111 = vmatpush1.msra.mxu0 0.0
      %2112 = vmatprep.subr.mxu0 0.0
      %2113 = vmatpush1.msra.mxu0 0.0
      %2114 = vmatprep.subr.mxu0 0.0
      %2115 = vmatpush1.msra.mxu0 0.0
      %2116 = vmatprep.subr.mxu0 0.0
      %2117 = vmatpush1.msra.mxu0 0.0
      %2118 = vmatprep.subr.mxu0 0.0
      %2119 = vmatpush1.msra.mxu0 0.0
      %2120 = vmatprep.subr.mxu0 0.0
      %2121 = vmatpush1.msra.mxu0 0.0
      %2122 = vmatprep.subr.mxu0 0.0
      %2123 = vmatpush1.msra.mxu0 0.0
      %2124 = vmatprep.subr.mxu0 0.0
      %2125 = vmatpush1.msra.mxu0 0.0
      %2126 = vmatprep.subr.mxu0 0.0
      %2127 = vmatpush1.msra.mxu0 0.0
      %2128 = vmatprep.subr.mxu0 0.0
      %2129 = vmatpush1.msra.mxu0 0.0
      %2130 = vmatprep.subr.mxu0 0.0
      %2131 = vmatpush1.msra.mxu0 0.0
      %2132 = vmatprep.subr.mxu0 0.0
      %2133 = vmatpush1.msra.mxu0 0.0
      %2134 = vmatprep.subr.mxu0 0.0
      %2135 = vmatpush1.msra.mxu0 0.0
      %2136 = vmatprep.subr.mxu0 0.0
      %2137 = vmatpush1.msra.mxu0 0.0
      %2138 = vmatprep.subr.mxu0 0.0
      %2139 = vmatpush1.msra.mxu0 0.0
      %2140 = vmatprep.subr.mxu0 0.0
      %2141 = vmatpush1.msra.mxu0 0.0
      %2142 = vmatprep.subr.mxu0 0.0
      %2143 = vmatpush1.msra.mxu0 0.0
      %2144 = vmatprep.mubr.f32.mxu0 0.0
      %2145 = vmatmul.mubr.f32.gmra.mrb[0].mxu0 %v2007
      %v2146 = vpop.f32.mrb[0].mxu0
      %v2147 = vadd.f32 %v2004, %v2146
      %v2148 = vpop.f32.mrb[0].mxu0
      %2149 = vdwg.mxu0
      %v2150 = vpack.c.bf16 %v2076, %v2076
      %v2151 = vpack.c.bf16 %v2078, %v2078
      %v2152 = vpack.c.bf16 %v2147, %v2147
      %v2156 = vunpack.c.l.b16 %v2150
      %v2157 = vunpack.c.l.b16 %v2151
      %v2158 = vunpack.c.l.b16 %v2152
      %v2159 = vpack.c.b16 %v2157, %v2156
      %v2160 = vpack.c.b16 %v2158, %v2158
      %s2163 = scalar_lea.vmem %s345, 36
      %2164 = vst [vmem:[%s2163] sm:$0xff] %v2159
      %2165 = vst.msk [vmem:[%s2163 + $0x8] sm:$0xf] %vm1554, %v2160
      %v2166 = vld [vmem:[%s6] sm:$0x7]
      %v2168 = vlaneseq
      %v2169 = vshrl.u32 %v2168, 7
      %v2170 = vsub.s32 0, %v2169
      %v2171 = vrot.slane %v2166, %v2170
      %v2172 = vlaneseq
      %v2173 = vshrl.u32 %v2172, 7
      %v2174 = vsub.s32 1, %v2173
      %v2175 = vrot.slane %v2166, %v2174
      %v2176 = vlaneseq
      %v2177 = vshrl.u32 %v2176, 7
      %v2178 = vsub.s32 2, %v2177
      %v2179 = vrot.slane %v2166, %v2178
      %v2183 = vmul.f32 %v2076, %v2171
      %v2184 = vmul.f32 %v2078, %v2175
      %v2185 = vmul.f32 %v2147, %v2179
      %v2186 = vadd.f32 %v2183, %v2184
      %v2187 = vsel %vm1577, %v2185, 0.0
      %v2188 = vadd.f32 %v2186, %v2187
      %2189 = vadd.xlane.f32.xlu0 %v2188
      %v2190 = vpop.xlane.xlu0 %2189
      %v2191 = vadd.f32 %v1988, %v2190
      %v2192 = vmul.f32 %v2183, %v2076
      %v2193 = vmul.f32 %v2184, %v2078
      %v2194 = vmul.f32 %v2185, %v2147
      %v2195 = vadd.f32 %v2192, %v2193
      %v2196 = vsel %vm1577, %v2194, 0.0
      %v2197 = vadd.f32 %v2195, %v2196
      %2198 = vadd.xlane.f32.xlu0 %v2197
      %v2199 = vpop.xlane.xlu0 %2198
      %v2200 = vadd.f32 %v1997, %v2199
      %vm2201 = vcmask 7168
      %2202 = vst.msk [vmem:[%s349] sm:$0xff] %vm2201, %v2191
      %2203 = vst.msk [vmem:[%s353] sm:$0xff] %vm2201, %v2200
      %p2204 = scmp.lt.s32.totalorder %s21, 1
      %s2205 = scalar_select %p2204, %s21, 1
      %s2206 = smul.addr %s2205, 12
      %s2207 = smul.addr %s2206, 4
      %s2208 = scalar_lea.vmem %s7, %s2207
      %p2209 = scmp.lt.s32.totalorder %s21, 1
      %s2210 = scalar_select %p2209, %s21, 1
      %s2211 = smul.addr %s2210, 8
      %s2212 = scalar_lea.vmem %s8, %s2211
      %p2213 = scmp.lt.s32.totalorder %s21, 1
      %s2214 = scalar_select %p2213, %s21, 1
      %s2215 = smul.addr %s2214, 8
      %s2216 = scalar_lea.vmem %s9, %s2215
      // Predicated region
      $region49: #{conv_transpose_block_2d.1} parent=47 // pred_check
        %p2217 = pneg %p191
      $region50: #{conv_transpose_block_2d.1} parent=47 // pred_check_branch
        %2219 = sbr.rel (%p2217) target = $region52
      $region51: #{conv_transpose_block_2d.1} parent=47 // pred_region
        _
      $region52: #{conv_transpose_block_2d.1} parent=47 // pred_fallthru
        _
      // Predicated region
      $region53: #{conv_transpose_block_2d.1} parent=47 // pred_check
        %p2220 = pneg %p217
      $region54: #{conv_transpose_block_2d.1} parent=47 // pred_check_branch
        %2222 = sbr.rel (%p2220) target = $region56
      $region55: #{conv_transpose_block_2d.1} parent=47 // pred_region
        _
      $region56: #{conv_transpose_block_2d.1} parent=47 // pred_fallthru
        _
      // Predicated region
      $region57: #{conv_transpose_block_2d.1} parent=47 // pred_check
        %p2223 = pneg %p243
      $region58: #{conv_transpose_block_2d.1} parent=47 // pred_check_branch
        %2225 = sbr.rel (%p2223) target = $region60
      $region59: #{conv_transpose_block_2d.1} parent=47 // pred_region
        _
      $region60: #{conv_transpose_block_2d.1} parent=47 // pred_fallthru
        _
    $region48: #{conv_transpose_block_2d.1} parent=5 // pred_fallthru
      _
    %p2226 = scmp.le.s32.totalorder 2, %s16
    // Predicated region
    $region61: #{conv_transpose_block_2d.1} parent=5 // pred_check
      %p2227 = pneg %p2226
    $region62: #{conv_transpose_block_2d.1} parent=5 // pred_check_branch
      %2229 = sbr.rel (%p2227) target = $region64
    $region63: #{conv_transpose_block_2d.1} parent=5 // pred_region
      %s2230 = ssub.s32 %s16, 2
      // Predicated region
      $region65: #{conv_transpose_block_2d.1} parent=63 // pred_check
        %p2231 = pneg %p197
      $region66: #{conv_transpose_block_2d.1} parent=63 // pred_check_branch
        %2233 = sbr.rel (%p2231) target = $region68
      $region67: #{conv_transpose_block_2d.1} parent=63 // pred_region
        %p2234 = scmp.lt.s32.totalorder %s22, 1
        %s2235 = scalar_select %p2234, %s22, 1
        %s2236 = smul.addr %s2235, 12
        %s2237 = smul.addr %s2236, 4
        %s2238 = scalar_lea.vmem %s7, %s2237
      $region68: #{conv_transpose_block_2d.1} parent=63 // pred_fallthru
        _
      // Predicated region
      $region69: #{conv_transpose_block_2d.1} parent=63 // pred_check
        %p2239 = pneg %p223
      $region70: #{conv_transpose_block_2d.1} parent=63 // pred_check_branch
        %2241 = sbr.rel (%p2239) target = $region72
      $region71: #{conv_transpose_block_2d.1} parent=63 // pred_region
        %p2242 = scmp.lt.s32.totalorder %s22, 1
        %s2243 = scalar_select %p2242, %s22, 1
        %s2244 = smul.addr %s2243, 8
        %s2245 = scalar_lea.vmem %s8, %s2244
      $region72: #{conv_transpose_block_2d.1} parent=63 // pred_fallthru
        _
      // Predicated region
      $region73: #{conv_transpose_block_2d.1} parent=63 // pred_check
        %p2246 = pneg %p249
      $region74: #{conv_transpose_block_2d.1} parent=63 // pred_check_branch
        %2248 = sbr.rel (%p2246) target = $region76
      $region75: #{conv_transpose_block_2d.1} parent=63 // pred_region
        %p2249 = scmp.lt.s32.totalorder %s22, 1
        %s2250 = scalar_select %p2249, %s22, 1
        %s2251 = smul.addr %s2250, 8
        %s2252 = scalar_lea.vmem %s9, %s2251
      $region76: #{conv_transpose_block_2d.1} parent=63 // pred_fallthru
        _
    $region64: #{conv_transpose_block_2d.1} parent=5 // pred_fallthru
      _
  $region6: #{conv_transpose_block_2d.1} parent=0 // loop_footer
    %s20 = sadd.s32 1, %s16
  $region7: #{conv_transpose_block_2d.1} parent=0 // loop_footer_branch
    %15 = sbr.rel target = $region3
  $region8: #{conv_transpose_block_2d.1} parent=0 // loop_exit
    _

</llo_original>
